<compile_context>
chip_gen: v5e
topology: v5e:2x2
jax: 0.10.0
libtpu: 0.0.40
codegen_flags: <defaults>
</compile_context>

<pallas_src>
import jax
import jax.numpy as jnp
import numpy as np
from jax import lax
from jax.experimental import pallas as pl
from jax.experimental.pallas import tpu as pltpu

KS = 3            # kernel_size of CoTAttention
G = 4             # conv groups (module hard-codes groups=4)
KK = KS * KS


# ------------------------------- Pallas wrapper ----------------------------- #
def cot_attention_pallas(x, kernel_params, use_bf16=True, batch_tile=2):
    B, C, H, W = x.shape
    HW = H * W
    PAD = W + 1                     # covers the largest flat shift |dy*W + dx|
    HWP = HW + 2 * PAD
    gs = C // G
    Bt = max(1, min(batch_tile, B))
    assert B % Bt == 0, "batch must be divisible by batch_tile"
    L = Bt * HW                     # lane width seen by the matmuls

    (m_neg, m_pos, wkg, k_shift, wv_s, v_shift,
     wa1_s, a1_shift, wa2_avg) = kernel_params
    Cq = wa1_s.shape[0]

    cdt = jnp.bfloat16 if use_bf16 else jnp.float32

    # flat activations, zero-padded along HW so every shifted window is in-bounds
    xp = jnp.pad(x.reshape(B, C, HW), ((0, 0), (0, 0), (PAD, PAD))).astype(cdt)
    mneg_c = m_neg.astype(cdt)      # 0/1 masks are exact in bf16
    mpos_c = m_pos.astype(cdt)
    wkg_c = wkg.astype(cdt)
    wv_c = wv_s.astype(cdt)
    wa1_c = wa1_s.astype(cdt)
    wa2_c = wa2_avg.astype(cdt)

    def kernel(xp_ref, mn_ref, mp_ref, wkg_ref, ksh_ref, wv_ref, vsh_ref,
               wa1_ref, a1sh_ref, wa2_ref, o_ref, scr_k, y_scr):
        # ---- per-image padded activations + the two pre-masked variants --------
        # m_neg zeroes image column W-1 (the "column -1" wrap-around source of the
        # dx=-1 taps); m_pos zeroes column 0 (the "column W" source of dx=+1 taps).
        # dx=0 taps read their out-of-image rows from the PAD region (already 0).
        xc = [xp_ref[j] for j in range(Bt)]                    # (C, HWP)
        xm = [xc[j] * mn_ref[...] for j in range(Bt)]          # for dx = -1 taps
        xq = [xc[j] * mp_ref[...] for j in range(Bt)]          # for dx = +1 taps

        # ---- the 9 shifted windows, each (C, Bt*HW); one materialization per tap
        wins = []
        for t in range(KK):
            sy, sx = t // KS - 1, t % KS - 1
            d = sy * W + sx
            srcs = xc if sx == 0 else (xm if sx < 0 else xq)
            parts = [srcs[j][:, PAD + d:PAD + d + HW] for j in range(Bt)]
            wins.append(parts[0] if Bt == 1 else jnp.concatenate(parts, axis=1))
        x_cat = wins[KK // 2]          # centre tap == the unshifted activations

        # ---- stack taps group-major into the conv operand scratch --------------
        # row layout: r = g*(KK*gs) + t*gs + i  (group, tap, within-group channel)
        for t in range(KK):
            for g in range(G):
                r0 = g * KK * gs + t * gs
                scr_k[r0:r0 + gs, :] = wins[t][g * gs:(g + 1) * gs, :]

        # ---- key_embed: grouped 3x3 conv as 4 deep-K matmuls + shift + ReLU ----
        ksh = ksh_ref[...]
        for g in range(G):
            kg = jnp.dot(wkg_ref[g],
                         scr_k[g * KK * gs:(g + 1) * KK * gs, :],
                         preferred_element_type=jnp.float32)
            kg = jnp.maximum(kg + ksh[g * gs:(g + 1) * gs, :], 0.0)
            y_scr[g * gs:(g + 1) * gs, :] = kg.astype(cdt)     # k1 half of [k1; x]
        y_scr[C:, :] = x_cat                                   # x half of [k1; x]

        # ---- value_embed: 1x1 conv (scale folded) + shift -----------------------
        v = jnp.dot(wv_ref[...], x_cat,
                    preferred_element_type=jnp.float32) + vsh_ref[...]

        # ---- attention_embed on concat([k1, x]) as a single K=2C matmul --------
        a1 = jnp.dot(wa1_ref[...], y_scr[...], preferred_element_type=jnp.float32)
        a1 = jnp.maximum(a1 + a1sh_ref[...], 0.0)
        # second 1x1 conv with the KS*KS mean pre-folded; bias dropped (softmax inv.)
        att = jnp.dot(wa2_ref[...], a1.astype(cdt),
                      preferred_element_type=jnp.float32)

        # ---- per-image softmax over the spatial lanes, modulate v, add k1 ------
        k1 = y_scr[:C, :].astype(jnp.float32)
        for j in range(Bt):
            lo = j * HW
            aj = att[:, lo:lo + HW]
            e = jnp.exp(aj - jnp.max(aj, axis=-1, keepdims=True))
            den = jnp.sum(e, axis=-1, keepdims=True)
            if use_bf16:
                p = e * pl.reciprocal(den, approx=True)        # EUP, ~free
            else:
                p = e / den                                    # exact on f32 check
            k2 = p * v[:, lo:lo + HW]
            o_ref[j] = (k1[:, lo:lo + HW] + k2).astype(o_ref.dtype)

    def wspec(arr):
        nd = arr.ndim
        return pl.BlockSpec(arr.shape, lambda b, _n=nd: (0,) * _n)

    out = pl.pallas_call(
        kernel,
        out_shape=jax.ShapeDtypeStruct((B, C, HW), x.dtype),
        grid_spec=pltpu.PrefetchScalarGridSpec(
            num_scalar_prefetch=0,
            grid=(B // Bt,),
            in_specs=[
                pl.BlockSpec((Bt, C, HWP), lambda b: (b, 0, 0)),
                wspec(mneg_c), wspec(mpos_c),
                wspec(wkg_c), wspec(k_shift),
                wspec(wv_c), wspec(v_shift),
                wspec(wa1_c), wspec(a1_shift),
                wspec(wa2_c),
            ],
            out_specs=pl.BlockSpec((Bt, C, HW), lambda b: (b, 0, 0)),
            scratch_shapes=[
                pltpu.VMEM((KK * C, L), cdt),   # group-major stacked conv windows
                pltpu.VMEM((2 * C, L), cdt),    # concat([k1, x]) attention operand
            ]),
        compiler_params=pltpu.CompilerParams(
            dimension_semantics=("parallel",),
            vmem_limit_bytes=32 * 1024 * 1024),
    )(xp, mneg_c, mpos_c, wkg_c, k_shift, wv_c, v_shift, wa1_c, a1_shift, wa2_c)

    return out.reshape(B, C, H, W)


# ------------------------------ parameter setup ----------------------------- #
def make_params(key, C, H, W):
    """Deterministic synthetic parameters matching the PyTorch module shapes."""
    gs = C // G            # in-channels per group of the grouped conv
    Cq = 2 * C // 4        # attention bottleneck channels
    HW = H * W
    PAD = W + 1
    eps = 1e-5
    keys = jax.random.split(key, 17)

    # key_embed: Conv2d(C, C, 3, padding=1, groups=4, bias=False) + BN + ReLU
    wk = jax.random.normal(keys[0], (C, gs, KS, KS), jnp.float32) * 0.2
    k_gamma = 1.0 + 0.1 * jax.random.normal(keys[1], (C,), jnp.float32)
    k_beta = 0.1 * jax.random.normal(keys[2], (C,), jnp.float32)
    k_mean = 0.1 * jax.random.normal(keys[3], (C,), jnp.float32)
    k_var = 1.0 + 0.1 * jnp.abs(jax.random.normal(keys[4], (C,), jnp.float32))

    # value_embed: Conv2d(C, C, 1, bias=False) + BN
    wv = jax.random.normal(keys[5], (C, C), jnp.float32) * 0.2
    v_gamma = 1.0 + 0.1 * jax.random.normal(keys[6], (C,), jnp.float32)
    v_beta = 0.1 * jax.random.normal(keys[7], (C,), jnp.float32)
    v_mean = 0.1 * jax.random.normal(keys[8], (C,), jnp.float32)
    v_var = 1.0 + 0.1 * jnp.abs(jax.random.normal(keys[9], (C,), jnp.float32))

    # attention_embed: Conv2d(2C, Cq, 1, bias=False)+BN+ReLU, Conv2d(Cq, KK*C, 1)
    wa1 = jax.random.normal(keys[10], (Cq, 2 * C), jnp.float32) * 0.2
    a1_gamma = 1.0 + 0.1 * jax.random.normal(keys[11], (Cq,), jnp.float32)
    a1_beta = 0.1 * jax.random.normal(keys[12], (Cq,), jnp.float32)
    a1_mean = 0.1 * jax.random.normal(keys[13], (Cq,), jnp.float32)
    a1_var = 1.0 + 0.1 * jnp.abs(jax.random.normal(keys[14], (Cq,), jnp.float32))
    wa2 = jax.random.normal(keys[15], (KK * C, Cq), jnp.float32) * 0.2
    b2 = 0.1 * jax.random.normal(keys[16], (KK * C,), jnp.float32)

    # eval-mode BN folded to per-channel scale/shift
    def fold(gamma, beta, mean, var):
        scale = gamma / jnp.sqrt(var + eps)
        shift = beta - mean * scale
        return scale, shift

    k_scale, k_shift = fold(k_gamma, k_beta, k_mean, k_var)
    v_scale, v_shift = fold(v_gamma, v_beta, v_mean, v_var)
    a1_scale, a1_shift = fold(a1_gamma, a1_beta, a1_mean, a1_var)

    # per-group tap-stacked grouped-conv weights with the BN scale folded in:
    #   wkg[g, o, t*gs + i] = wk[g*gs+o, i, t//KS, t%KS] * k_scale[g*gs+o]
    wk_np = np.asarray(wk)
    ks_np = np.asarray(k_scale)
    wkg = np.zeros((G, gs, KK * gs), np.float32)
    for g in range(G):
        for o in range(gs):
            co = g * gs + o
            for t in range(KK):
                dy, dx = t // KS, t % KS
                for i in range(gs):
                    wkg[g, o, t * gs + i] = wk_np[co, i, dy, dx] * ks_np[co]

    # column masks over the padded flat layout (wrap-around killers for dx=+-1):
    #   m_neg zeroes image column W-1 (read as "column -1" by dx=-1 taps)
    #   m_pos zeroes image column 0   (read as "column W"  by dx=+1 taps)
    def col_mask(col):
        m = np.ones((H, W), np.float32)
        m[:, col] = 0.0
        return np.pad(m.reshape(1, HW), ((0, 0), (PAD, PAD)), constant_values=1.0)

    m_neg = col_mask(W - 1)
    m_pos = col_mask(0)

    # BN scales folded into the 1x1 conv weights
    wv_s = np.asarray(wv) * np.asarray(v_scale)[:, None]
    wa1_s = np.asarray(wa1) * np.asarray(a1_scale)[:, None]
    # avg-fold of the KS*KS attention slots; folded per-channel bias dropped
    # (softmax over the spatial axis is invariant to a per-row constant)
    wa2_avg = np.asarray(wa2).reshape(C, KK, Cq).mean(axis=1)

    kernel_params = (jnp.asarray(m_neg), jnp.asarray(m_pos), jnp.asarray(wkg),
                     k_shift.reshape(C, 1), jnp.asarray(wv_s),
                     v_shift.reshape(C, 1), jnp.asarray(wa1_s),
                     a1_shift.reshape(Cq, 1), jnp.asarray(wa2_avg))
    raw = dict(wk=wk, wv=wv, wa1=wa1, wa2=wa2, b2=b2,
               k_scale=k_scale, k_shift=k_shift,
               v_scale=v_scale, v_shift=v_shift,
               a1_scale=a1_scale, a1_shift=a1_shift)
    return kernel_params, raw


# --------------------------- pure-JAX reference ----------------------------- #
def reference(x, raw):
    B, C, H, W = x.shape
    HW = H * W
    P = lax.Precision.HIGHEST
    dn = ('NCHW', 'OIHW', 'NCHW')

    def bn(z, scale, shift):
        return z * scale.reshape(1, -1, 1, 1) + shift.reshape(1, -1, 1, 1)

    k1 = lax.conv_general_dilated(x, raw['wk'], (1, 1), 'SAME',
                                  dimension_numbers=dn, feature_group_count=4,
                                  precision=P)
    k1 = jnp.maximum(bn(k1, raw['k_scale'], raw['k_shift']), 0.0)

    v = lax.conv_general_dilated(x, raw['wv'][:, :, None, None], (1, 1), 'SAME',
                                 dimension_numbers=dn, precision=P)
    v = bn(v, raw['v_scale'], raw['v_shift']).reshape(B, C, HW)

    y = jnp.concatenate([k1, x], axis=1)
    a1 = lax.conv_general_dilated(y, raw['wa1'][:, :, None, None], (1, 1), 'SAME',
                                  dimension_numbers=dn, precision=P)
    a1 = jnp.maximum(bn(a1, raw['a1_scale'], raw['a1_shift']), 0.0)
    a2 = lax.conv_general_dilated(a1, raw['wa2'][:, :, None, None], (1, 1), 'SAME',
                                  dimension_numbers=dn, precision=P)
    a2 = a2 + raw['b2'].reshape(1, -1, 1, 1)

    att = a2.reshape(B, C, KS * KS, H, W).mean(2).reshape(B, C, HW)
    k2 = jax.nn.softmax(att, axis=-1) * v
    return k1 + k2.reshape(B, C, H, W)


if __name__ == "__main__":
    key = jax.random.PRNGKey(0)
    B, C, H, W = 4, 8, 16, 16   # dim=8 (divisible by groups=4), 16x16 spatial
    xk, pk = jax.random.split(key)
    x = jax.random.normal(xk, (B, C, H, W), jnp.float32)

    kernel_params, raw = make_params(pk, C, H, W)
    ref = jax.block_until_ready(reference(x, raw))

    # structural / algebraic check with f32 matmul operands + exact softmax divide
    out_f32 = jax.block_until_ready(
        cot_attention_pallas(x, kernel_params, use_bf16=False, batch_tile=2))
    assert out_f32.shape == (B, C, H, W)
    np.testing.assert_allclose(np.asarray(out_f32), np.asarray(ref),
                               atol=2e-3, rtol=2e-3)

    # also exercise the single-image-per-step path (grid = B)
    out_f32_b1 = jax.block_until_ready(
        cot_attention_pallas(x, kernel_params, use_bf16=False, batch_tile=1))
    np.testing.assert_allclose(np.asarray(out_f32_b1), np.asarray(ref),
                               atol=2e-3, rtol=2e-3)

    # optimized path: bf16 MXU operands with f32 accumulation (looser tolerance
    # vs. the all-f32 reference, consistent with bf16's ~3 significant digits)
    out_bf16 = jax.block_until_ready(
        cot_attention_pallas(x, kernel_params, use_bf16=True, batch_tile=2))
    assert out_bf16.shape == (B, C, H, W)
    np.testing.assert_allclose(np.asarray(out_bf16), np.asarray(ref),
                               atol=3e-2, rtol=3e-2)

    print("KERNEL_OK")
</pallas_src>

<mosaic_0001>
module attributes {stable_mosaic.version = 11 : i64} {
  func.func @kernel(%arg0: i32, %arg1: memref<2x8x290xf32, #tpu.memory_space<vmem>>, %arg2: memref<1x290xf32, #tpu.memory_space<vmem>>, %arg3: memref<1x290xf32, #tpu.memory_space<vmem>>, %arg4: memref<4x2x18xf32, #tpu.memory_space<vmem>>, %arg5: memref<8x1xf32, #tpu.memory_space<vmem>>, %arg6: memref<8x8xf32, #tpu.memory_space<vmem>>, %arg7: memref<8x1xf32, #tpu.memory_space<vmem>>, %arg8: memref<4x16xf32, #tpu.memory_space<vmem>>, %arg9: memref<4x1xf32, #tpu.memory_space<vmem>>, %arg10: memref<8x4xf32, #tpu.memory_space<vmem>>, %arg11: memref<2x8x256xf32, #tpu.memory_space<vmem>>, %arg12: memref<72x512xf32, #tpu.memory_space<vmem>>, %arg13: memref<16x512xf32, #tpu.memory_space<vmem>>) attributes {dimension_semantics = [#tpu.dimension_semantics<parallel>], iteration_bounds = array<i64: 2>, scalar_prefetch = 0 : i64, scratch_operands = 2 : i64, tpu.core_type = #tpu.core_type<tc>, window_params = [{transform_indices = @transform_0, window_bounds = array<i64: 2, 8, 290>}, {pipeline_mode = #tpu.pipeline_mode<synchronous>, transform_indices = @transform_1, window_bounds = array<i64: 1, 290>}, {pipeline_mode = #tpu.pipeline_mode<synchronous>, transform_indices = @transform_2, window_bounds = array<i64: 1, 290>}, {pipeline_mode = #tpu.pipeline_mode<synchronous>, transform_indices = @transform_3, window_bounds = array<i64: 4, 2, 18>}, {pipeline_mode = #tpu.pipeline_mode<synchronous>, transform_indices = @transform_4, window_bounds = array<i64: 8, 1>}, {pipeline_mode = #tpu.pipeline_mode<synchronous>, transform_indices = @transform_5, window_bounds = array<i64: 8, 8>}, {pipeline_mode = #tpu.pipeline_mode<synchronous>, transform_indices = @transform_6, window_bounds = array<i64: 8, 1>}, {pipeline_mode = #tpu.pipeline_mode<synchronous>, transform_indices = @transform_7, window_bounds = array<i64: 4, 16>}, {pipeline_mode = #tpu.pipeline_mode<synchronous>, transform_indices = @transform_8, window_bounds = array<i64: 4, 1>}, {pipeline_mode = #tpu.pipeline_mode<synchronous>, transform_indices = @transform_9, window_bounds = array<i64: 8, 4>}, {transform_indices = @transform_10, window_bounds = array<i64: 2, 8, 256>}]} {
    %c0 = arith.constant 0 : index
    %c0_0 = arith.constant 0 : index
    %c0_1 = arith.constant 0 : index
    %0 = vector.load %arg1[%c0, %c0_0, %c0_1] : memref<2x8x290xf32, #tpu.memory_space<vmem>>, vector<1x8x290xf32>
    %1 = vector.shape_cast %0 : vector<1x8x290xf32> to vector<8x290xf32>
    %c1 = arith.constant 1 : index
    %c0_2 = arith.constant 0 : index
    %c0_3 = arith.constant 0 : index
    %2 = vector.load %arg1[%c1, %c0_2, %c0_3] : memref<2x8x290xf32, #tpu.memory_space<vmem>>, vector<1x8x290xf32>
    %3 = vector.shape_cast %2 : vector<1x8x290xf32> to vector<8x290xf32>
    %c0_4 = arith.constant 0 : index
    %c0_5 = arith.constant 0 : index
    %4 = vector.load %arg2[%c0_4, %c0_5] : memref<1x290xf32, #tpu.memory_space<vmem>>, vector<1x290xf32>
    %5 = vector.broadcast %4 : vector<1x290xf32> to vector<8x290xf32>
    %6 = arith.mulf %1, %5 : vector<8x290xf32>
    %c0_6 = arith.constant 0 : index
    %c0_7 = arith.constant 0 : index
    %7 = vector.load %arg2[%c0_6, %c0_7] : memref<1x290xf32, #tpu.memory_space<vmem>>, vector<1x290xf32>
    %8 = vector.broadcast %7 : vector<1x290xf32> to vector<8x290xf32>
    %9 = arith.mulf %3, %8 : vector<8x290xf32>
    %c0_8 = arith.constant 0 : index
    %c0_9 = arith.constant 0 : index
    %10 = vector.load %arg3[%c0_8, %c0_9] : memref<1x290xf32, #tpu.memory_space<vmem>>, vector<1x290xf32>
    %11 = vector.broadcast %10 : vector<1x290xf32> to vector<8x290xf32>
    %12 = arith.mulf %1, %11 : vector<8x290xf32>
    %c0_10 = arith.constant 0 : index
    %c0_11 = arith.constant 0 : index
    %13 = vector.load %arg3[%c0_10, %c0_11] : memref<1x290xf32, #tpu.memory_space<vmem>>, vector<1x290xf32>
    %14 = vector.broadcast %13 : vector<1x290xf32> to vector<8x290xf32>
    %15 = arith.mulf %3, %14 : vector<8x290xf32>
    %16 = vector.extract_strided_slice %6 {offsets = [0, 0], sizes = [8, 256], strides = [1, 1]} : vector<8x290xf32> to vector<8x256xf32>
    %17 = vector.extract_strided_slice %9 {offsets = [0, 0], sizes = [8, 256], strides = [1, 1]} : vector<8x290xf32> to vector<8x256xf32>
    %18 = tpu.concatenate %16, %17 in 1 : vector<8x256xf32>, vector<8x256xf32> -> vector<8x512xf32>
    %19 = vector.extract_strided_slice %1 {offsets = [0, 1], sizes = [8, 256], strides = [1, 1]} : vector<8x290xf32> to vector<8x256xf32>
    %20 = vector.extract_strided_slice %3 {offsets = [0, 1], sizes = [8, 256], strides = [1, 1]} : vector<8x290xf32> to vector<8x256xf32>
    %21 = tpu.concatenate %19, %20 in 1 : vector<8x256xf32>, vector<8x256xf32> -> vector<8x512xf32>
    %22 = vector.extract_strided_slice %12 {offsets = [0, 2], sizes = [8, 256], strides = [1, 1]} : vector<8x290xf32> to vector<8x256xf32>
    %23 = vector.extract_strided_slice %15 {offsets = [0, 2], sizes = [8, 256], strides = [1, 1]} : vector<8x290xf32> to vector<8x256xf32>
    %24 = tpu.concatenate %22, %23 in 1 : vector<8x256xf32>, vector<8x256xf32> -> vector<8x512xf32>
    %25 = vector.extract_strided_slice %6 {offsets = [0, 16], sizes = [8, 256], strides = [1, 1]} : vector<8x290xf32> to vector<8x256xf32>
    %26 = vector.extract_strided_slice %9 {offsets = [0, 16], sizes = [8, 256], strides = [1, 1]} : vector<8x290xf32> to vector<8x256xf32>
    %27 = tpu.concatenate %25, %26 in 1 : vector<8x256xf32>, vector<8x256xf32> -> vector<8x512xf32>
    %28 = vector.extract_strided_slice %1 {offsets = [0, 17], sizes = [8, 256], strides = [1, 1]} : vector<8x290xf32> to vector<8x256xf32>
    %29 = vector.extract_strided_slice %3 {offsets = [0, 17], sizes = [8, 256], strides = [1, 1]} : vector<8x290xf32> to vector<8x256xf32>
    %30 = tpu.concatenate %28, %29 in 1 : vector<8x256xf32>, vector<8x256xf32> -> vector<8x512xf32>
    %31 = vector.extract_strided_slice %12 {offsets = [0, 18], sizes = [8, 256], strides = [1, 1]} : vector<8x290xf32> to vector<8x256xf32>
    %32 = vector.extract_strided_slice %15 {offsets = [0, 18], sizes = [8, 256], strides = [1, 1]} : vector<8x290xf32> to vector<8x256xf32>
    %33 = tpu.concatenate %31, %32 in 1 : vector<8x256xf32>, vector<8x256xf32> -> vector<8x512xf32>
    %34 = vector.extract_strided_slice %6 {offsets = [0, 32], sizes = [8, 256], strides = [1, 1]} : vector<8x290xf32> to vector<8x256xf32>
    %35 = vector.extract_strided_slice %9 {offsets = [0, 32], sizes = [8, 256], strides = [1, 1]} : vector<8x290xf32> to vector<8x256xf32>
    %36 = tpu.concatenate %34, %35 in 1 : vector<8x256xf32>, vector<8x256xf32> -> vector<8x512xf32>
    %37 = vector.extract_strided_slice %1 {offsets = [0, 33], sizes = [8, 256], strides = [1, 1]} : vector<8x290xf32> to vector<8x256xf32>
    %38 = vector.extract_strided_slice %3 {offsets = [0, 33], sizes = [8, 256], strides = [1, 1]} : vector<8x290xf32> to vector<8x256xf32>
    %39 = tpu.concatenate %37, %38 in 1 : vector<8x256xf32>, vector<8x256xf32> -> vector<8x512xf32>
    %40 = vector.extract_strided_slice %12 {offsets = [0, 34], sizes = [8, 256], strides = [1, 1]} : vector<8x290xf32> to vector<8x256xf32>
    %41 = vector.extract_strided_slice %15 {offsets = [0, 34], sizes = [8, 256], strides = [1, 1]} : vector<8x290xf32> to vector<8x256xf32>
    %42 = tpu.concatenate %40, %41 in 1 : vector<8x256xf32>, vector<8x256xf32> -> vector<8x512xf32>
    %43 = vector.extract_strided_slice %18 {offsets = [0, 0], sizes = [2, 512], strides = [1, 1]} : vector<8x512xf32> to vector<2x512xf32>
    %c0_12 = arith.constant 0 : index
    %c0_13 = arith.constant 0 : index
    %44 = vector.load %arg12[%c0_12, %c0_13] : memref<72x512xf32, #tpu.memory_space<vmem>>, vector<2x512xf32>
    tpu.vector_store %arg12[%c0_12, %c0_13], %43 {strides = array<i32>} : memref<72x512xf32, #tpu.memory_space<vmem>>, vector<2x512xf32>,
    %45 = vector.extract_strided_slice %18 {offsets = [2, 0], sizes = [2, 512], strides = [1, 1]} : vector<8x512xf32> to vector<2x512xf32>
    %c18 = arith.constant 18 : index
    %c0_14 = arith.constant 0 : index
    %46 = vector.load %arg12[%c18, %c0_14] : memref<72x512xf32, #tpu.memory_space<vmem>>, vector<2x512xf32>
    tpu.vector_store %arg12[%c18, %c0_14], %45 {strides = array<i32>} : memref<72x512xf32, #tpu.memory_space<vmem>>, vector<2x512xf32>,
    %47 = vector.extract_strided_slice %18 {offsets = [4, 0], sizes = [2, 512], strides = [1, 1]} : vector<8x512xf32> to vector<2x512xf32>
    %c36 = arith.constant 36 : index
    %c0_15 = arith.constant 0 : index
    %48 = vector.load %arg12[%c36, %c0_15] : memref<72x512xf32, #tpu.memory_space<vmem>>, vector<2x512xf32>
    tpu.vector_store %arg12[%c36, %c0_15], %47 {strides = array<i32>} : memref<72x512xf32, #tpu.memory_space<vmem>>, vector<2x512xf32>,
    %49 = vector.extract_strided_slice %18 {offsets = [6, 0], sizes = [2, 512], strides = [1, 1]} : vector<8x512xf32> to vector<2x512xf32>
    %c54 = arith.constant 54 : index
    %c0_16 = arith.constant 0 : index
    %50 = vector.load %arg12[%c54, %c0_16] : memref<72x512xf32, #tpu.memory_space<vmem>>, vector<2x512xf32>
    tpu.vector_store %arg12[%c54, %c0_16], %49 {strides = array<i32>} : memref<72x512xf32, #tpu.memory_space<vmem>>, vector<2x512xf32>,
    %51 = vector.extract_strided_slice %21 {offsets = [0, 0], sizes = [2, 512], strides = [1, 1]} : vector<8x512xf32> to vector<2x512xf32>
    %c2 = arith.constant 2 : index
    %c0_17 = arith.constant 0 : index
    %52 = vector.load %arg12[%c2, %c0_17] : memref<72x512xf32, #tpu.memory_space<vmem>>, vector<2x512xf32>
    tpu.vector_store %arg12[%c2, %c0_17], %51 {strides = array<i32>} : memref<72x512xf32, #tpu.memory_space<vmem>>, vector<2x512xf32>,
    %53 = vector.extract_strided_slice %21 {offsets = [2, 0], sizes = [2, 512], strides = [1, 1]} : vector<8x512xf32> to vector<2x512xf32>
    %c20 = arith.constant 20 : index
    %c0_18 = arith.constant 0 : index
    %54 = vector.load %arg12[%c20, %c0_18] : memref<72x512xf32, #tpu.memory_space<vmem>>, vector<2x512xf32>
    tpu.vector_store %arg12[%c20, %c0_18], %53 {strides = array<i32>} : memref<72x512xf32, #tpu.memory_space<vmem>>, vector<2x512xf32>,
    %55 = vector.extract_strided_slice %21 {offsets = [4, 0], sizes = [2, 512], strides = [1, 1]} : vector<8x512xf32> to vector<2x512xf32>
    %c38 = arith.constant 38 : index
    %c0_19 = arith.constant 0 : index
    %56 = vector.load %arg12[%c38, %c0_19] : memref<72x512xf32, #tpu.memory_space<vmem>>, vector<2x512xf32>
    tpu.vector_store %arg12[%c38, %c0_19], %55 {strides = array<i32>} : memref<72x512xf32, #tpu.memory_space<vmem>>, vector<2x512xf32>,
    %57 = vector.extract_strided_slice %21 {offsets = [6, 0], sizes = [2, 512], strides = [1, 1]} : vector<8x512xf32> to vector<2x512xf32>
    %c56 = arith.constant 56 : index
    %c0_20 = arith.constant 0 : index
    %58 = vector.load %arg12[%c56, %c0_20] : memref<72x512xf32, #tpu.memory_space<vmem>>, vector<2x512xf32>
    tpu.vector_store %arg12[%c56, %c0_20], %57 {strides = array<i32>} : memref<72x512xf32, #tpu.memory_space<vmem>>, vector<2x512xf32>,
    %59 = vector.extract_strided_slice %24 {offsets = [0, 0], sizes = [2, 512], strides = [1, 1]} : vector<8x512xf32> to vector<2x512xf32>
    %c4 = arith.constant 4 : index
    %c0_21 = arith.constant 0 : index
    %60 = vector.load %arg12[%c4, %c0_21] : memref<72x512xf32, #tpu.memory_space<vmem>>, vector<2x512xf32>
    tpu.vector_store %arg12[%c4, %c0_21], %59 {strides = array<i32>} : memref<72x512xf32, #tpu.memory_space<vmem>>, vector<2x512xf32>,
    %61 = vector.extract_strided_slice %24 {offsets = [2, 0], sizes = [2, 512], strides = [1, 1]} : vector<8x512xf32> to vector<2x512xf32>
    %c22 = arith.constant 22 : index
    %c0_22 = arith.constant 0 : index
    %62 = vector.load %arg12[%c22, %c0_22] : memref<72x512xf32, #tpu.memory_space<vmem>>, vector<2x512xf32>
    tpu.vector_store %arg12[%c22, %c0_22], %61 {strides = array<i32>} : memref<72x512xf32, #tpu.memory_space<vmem>>, vector<2x512xf32>,
    %63 = vector.extract_strided_slice %24 {offsets = [4, 0], sizes = [2, 512], strides = [1, 1]} : vector<8x512xf32> to vector<2x512xf32>
    %c40 = arith.constant 40 : index
    %c0_23 = arith.constant 0 : index
    %64 = vector.load %arg12[%c40, %c0_23] : memref<72x512xf32, #tpu.memory_space<vmem>>, vector<2x512xf32>
    tpu.vector_store %arg12[%c40, %c0_23], %63 {strides = array<i32>} : memref<72x512xf32, #tpu.memory_space<vmem>>, vector<2x512xf32>,
    %65 = vector.extract_strided_slice %24 {offsets = [6, 0], sizes = [2, 512], strides = [1, 1]} : vector<8x512xf32> to vector<2x512xf32>
    %c58 = arith.constant 58 : index
    %c0_24 = arith.constant 0 : index
    %66 = vector.load %arg12[%c58, %c0_24] : memref<72x512xf32, #tpu.memory_space<vmem>>, vector<2x512xf32>
    tpu.vector_store %arg12[%c58, %c0_24], %65 {strides = array<i32>} : memref<72x512xf32, #tpu.memory_space<vmem>>, vector<2x512xf32>,
    %67 = vector.extract_strided_slice %27 {offsets = [0, 0], sizes = [2, 512], strides = [1, 1]} : vector<8x512xf32> to vector<2x512xf32>
    %c6 = arith.constant 6 : index
    %c0_25 = arith.constant 0 : index
    %68 = vector.load %arg12[%c6, %c0_25] : memref<72x512xf32, #tpu.memory_space<vmem>>, vector<2x512xf32>
    tpu.vector_store %arg12[%c6, %c0_25], %67 {strides = array<i32>} : memref<72x512xf32, #tpu.memory_space<vmem>>, vector<2x512xf32>,
    %69 = vector.extract_strided_slice %27 {offsets = [2, 0], sizes = [2, 512], strides = [1, 1]} : vector<8x512xf32> to vector<2x512xf32>
    %c24 = arith.constant 24 : index
    %c0_26 = arith.constant 0 : index
    %70 = vector.load %arg12[%c24, %c0_26] : memref<72x512xf32, #tpu.memory_space<vmem>>, vector<2x512xf32>
    tpu.vector_store %arg12[%c24, %c0_26], %69 {strides = array<i32>} : memref<72x512xf32, #tpu.memory_space<vmem>>, vector<2x512xf32>,
    %71 = vector.extract_strided_slice %27 {offsets = [4, 0], sizes = [2, 512], strides = [1, 1]} : vector<8x512xf32> to vector<2x512xf32>
    %c42 = arith.constant 42 : index
    %c0_27 = arith.constant 0 : index
    %72 = vector.load %arg12[%c42, %c0_27] : memref<72x512xf32, #tpu.memory_space<vmem>>, vector<2x512xf32>
    tpu.vector_store %arg12[%c42, %c0_27], %71 {strides = array<i32>} : memref<72x512xf32, #tpu.memory_space<vmem>>, vector<2x512xf32>,
    %73 = vector.extract_strided_slice %27 {offsets = [6, 0], sizes = [2, 512], strides = [1, 1]} : vector<8x512xf32> to vector<2x512xf32>
    %c60 = arith.constant 60 : index
    %c0_28 = arith.constant 0 : index
    %74 = vector.load %arg12[%c60, %c0_28] : memref<72x512xf32, #tpu.memory_space<vmem>>, vector<2x512xf32>
    tpu.vector_store %arg12[%c60, %c0_28], %73 {strides = array<i32>} : memref<72x512xf32, #tpu.memory_space<vmem>>, vector<2x512xf32>,
    %75 = vector.extract_strided_slice %30 {offsets = [0, 0], sizes = [2, 512], strides = [1, 1]} : vector<8x512xf32> to vector<2x512xf32>
    %c8 = arith.constant 8 : index
    %c0_29 = arith.constant 0 : index
    %76 = vector.load %arg12[%c8, %c0_29] : memref<72x512xf32, #tpu.memory_space<vmem>>, vector<2x512xf32>
    tpu.vector_store %arg12[%c8, %c0_29], %75 {strides = array<i32>} : memref<72x512xf32, #tpu.memory_space<vmem>>, vector<2x512xf32>,
    %77 = vector.extract_strided_slice %30 {offsets = [2, 0], sizes = [2, 512], strides = [1, 1]} : vector<8x512xf32> to vector<2x512xf32>
    %c26 = arith.constant 26 : index
    %c0_30 = arith.constant 0 : index
    %78 = vector.load %arg12[%c26, %c0_30] : memref<72x512xf32, #tpu.memory_space<vmem>>, vector<2x512xf32>
    tpu.vector_store %arg12[%c26, %c0_30], %77 {strides = array<i32>} : memref<72x512xf32, #tpu.memory_space<vmem>>, vector<2x512xf32>,
    %79 = vector.extract_strided_slice %30 {offsets = [4, 0], sizes = [2, 512], strides = [1, 1]} : vector<8x512xf32> to vector<2x512xf32>
    %c44 = arith.constant 44 : index
    %c0_31 = arith.constant 0 : index
    %80 = vector.load %arg12[%c44, %c0_31] : memref<72x512xf32, #tpu.memory_space<vmem>>, vector<2x512xf32>
    tpu.vector_store %arg12[%c44, %c0_31], %79 {strides = array<i32>} : memref<72x512xf32, #tpu.memory_space<vmem>>, vector<2x512xf32>,
    %81 = vector.extract_strided_slice %30 {offsets = [6, 0], sizes = [2, 512], strides = [1, 1]} : vector<8x512xf32> to vector<2x512xf32>
    %c62 = arith.constant 62 : index
    %c0_32 = arith.constant 0 : index
    %82 = vector.load %arg12[%c62, %c0_32] : memref<72x512xf32, #tpu.memory_space<vmem>>, vector<2x512xf32>
    tpu.vector_store %arg12[%c62, %c0_32], %81 {strides = array<i32>} : memref<72x512xf32, #tpu.memory_space<vmem>>, vector<2x512xf32>,
    %83 = vector.extract_strided_slice %33 {offsets = [0, 0], sizes = [2, 512], strides = [1, 1]} : vector<8x512xf32> to vector<2x512xf32>
    %c10 = arith.constant 10 : index
    %c0_33 = arith.constant 0 : index
    %84 = vector.load %arg12[%c10, %c0_33] : memref<72x512xf32, #tpu.memory_space<vmem>>, vector<2x512xf32>
    tpu.vector_store %arg12[%c10, %c0_33], %83 {strides = array<i32>} : memref<72x512xf32, #tpu.memory_space<vmem>>, vector<2x512xf32>,
    %85 = vector.extract_strided_slice %33 {offsets = [2, 0], sizes = [2, 512], strides = [1, 1]} : vector<8x512xf32> to vector<2x512xf32>
    %c28 = arith.constant 28 : index
    %c0_34 = arith.constant 0 : index
    %86 = vector.load %arg12[%c28, %c0_34] : memref<72x512xf32, #tpu.memory_space<vmem>>, vector<2x512xf32>
    tpu.vector_store %arg12[%c28, %c0_34], %85 {strides = array<i32>} : memref<72x512xf32, #tpu.memory_space<vmem>>, vector<2x512xf32>,
    %87 = vector.extract_strided_slice %33 {offsets = [4, 0], sizes = [2, 512], strides = [1, 1]} : vector<8x512xf32> to vector<2x512xf32>
    %c46 = arith.constant 46 : index
    %c0_35 = arith.constant 0 : index
    %88 = vector.load %arg12[%c46, %c0_35] : memref<72x512xf32, #tpu.memory_space<vmem>>, vector<2x512xf32>
    tpu.vector_store %arg12[%c46, %c0_35], %87 {strides = array<i32>} : memref<72x512xf32, #tpu.memory_space<vmem>>, vector<2x512xf32>,
    %89 = vector.extract_strided_slice %33 {offsets = [6, 0], sizes = [2, 512], strides = [1, 1]} : vector<8x512xf32> to vector<2x512xf32>
    %c64 = arith.constant 64 : index
    %c0_36 = arith.constant 0 : index
    %90 = vector.load %arg12[%c64, %c0_36] : memref<72x512xf32, #tpu.memory_space<vmem>>, vector<2x512xf32>
    tpu.vector_store %arg12[%c64, %c0_36], %89 {strides = array<i32>} : memref<72x512xf32, #tpu.memory_space<vmem>>, vector<2x512xf32>,
    %91 = vector.extract_strided_slice %36 {offsets = [0, 0], sizes = [2, 512], strides = [1, 1]} : vector<8x512xf32> to vector<2x512xf32>
    %c12 = arith.constant 12 : index
    %c0_37 = arith.constant 0 : index
    %92 = vector.load %arg12[%c12, %c0_37] : memref<72x512xf32, #tpu.memory_space<vmem>>, vector<2x512xf32>
    tpu.vector_store %arg12[%c12, %c0_37], %91 {strides = array<i32>} : memref<72x512xf32, #tpu.memory_space<vmem>>, vector<2x512xf32>,
    %93 = vector.extract_strided_slice %36 {offsets = [2, 0], sizes = [2, 512], strides = [1, 1]} : vector<8x512xf32> to vector<2x512xf32>
    %c30 = arith.constant 30 : index
    %c0_38 = arith.constant 0 : index
    %94 = vector.load %arg12[%c30, %c0_38] : memref<72x512xf32, #tpu.memory_space<vmem>>, vector<2x512xf32>
    tpu.vector_store %arg12[%c30, %c0_38], %93 {strides = array<i32>} : memref<72x512xf32, #tpu.memory_space<vmem>>, vector<2x512xf32>,
    %95 = vector.extract_strided_slice %36 {offsets = [4, 0], sizes = [2, 512], strides = [1, 1]} : vector<8x512xf32> to vector<2x512xf32>
    %c48 = arith.constant 48 : index
    %c0_39 = arith.constant 0 : index
    %96 = vector.load %arg12[%c48, %c0_39] : memref<72x512xf32, #tpu.memory_space<vmem>>, vector<2x512xf32>
    tpu.vector_store %arg12[%c48, %c0_39], %95 {strides = array<i32>} : memref<72x512xf32, #tpu.memory_space<vmem>>, vector<2x512xf32>,
    %97 = vector.extract_strided_slice %36 {offsets = [6, 0], sizes = [2, 512], strides = [1, 1]} : vector<8x512xf32> to vector<2x512xf32>
    %c66 = arith.constant 66 : index
    %c0_40 = arith.constant 0 : index
    %98 = vector.load %arg12[%c66, %c0_40] : memref<72x512xf32, #tpu.memory_space<vmem>>, vector<2x512xf32>
    tpu.vector_store %arg12[%c66, %c0_40], %97 {strides = array<i32>} : memref<72x512xf32, #tpu.memory_space<vmem>>, vector<2x512xf32>,
    %99 = vector.extract_strided_slice %39 {offsets = [0, 0], sizes = [2, 512], strides = [1, 1]} : vector<8x512xf32> to vector<2x512xf32>
    %c14 = arith.constant 14 : index
    %c0_41 = arith.constant 0 : index
    %100 = vector.load %arg12[%c14, %c0_41] : memref<72x512xf32, #tpu.memory_space<vmem>>, vector<2x512xf32>
    tpu.vector_store %arg12[%c14, %c0_41], %99 {strides = array<i32>} : memref<72x512xf32, #tpu.memory_space<vmem>>, vector<2x512xf32>,
    %101 = vector.extract_strided_slice %39 {offsets = [2, 0], sizes = [2, 512], strides = [1, 1]} : vector<8x512xf32> to vector<2x512xf32>
    %c32 = arith.constant 32 : index
    %c0_42 = arith.constant 0 : index
    %102 = vector.load %arg12[%c32, %c0_42] : memref<72x512xf32, #tpu.memory_space<vmem>>, vector<2x512xf32>
    tpu.vector_store %arg12[%c32, %c0_42], %101 {strides = array<i32>} : memref<72x512xf32, #tpu.memory_space<vmem>>, vector<2x512xf32>,
    %103 = vector.extract_strided_slice %39 {offsets = [4, 0], sizes = [2, 512], strides = [1, 1]} : vector<8x512xf32> to vector<2x512xf32>
    %c50 = arith.constant 50 : index
    %c0_43 = arith.constant 0 : index
    %104 = vector.load %arg12[%c50, %c0_43] : memref<72x512xf32, #tpu.memory_space<vmem>>, vector<2x512xf32>
    tpu.vector_store %arg12[%c50, %c0_43], %103 {strides = array<i32>} : memref<72x512xf32, #tpu.memory_space<vmem>>, vector<2x512xf32>,
    %105 = vector.extract_strided_slice %39 {offsets = [6, 0], sizes = [2, 512], strides = [1, 1]} : vector<8x512xf32> to vector<2x512xf32>
    %c68 = arith.constant 68 : index
    %c0_44 = arith.constant 0 : index
    %106 = vector.load %arg12[%c68, %c0_44] : memref<72x512xf32, #tpu.memory_space<vmem>>, vector<2x512xf32>
    tpu.vector_store %arg12[%c68, %c0_44], %105 {strides = array<i32>} : memref<72x512xf32, #tpu.memory_space<vmem>>, vector<2x512xf32>,
    %107 = vector.extract_strided_slice %42 {offsets = [0, 0], sizes = [2, 512], strides = [1, 1]} : vector<8x512xf32> to vector<2x512xf32>
    %c16 = arith.constant 16 : index
    %c0_45 = arith.constant 0 : index
    %108 = vector.load %arg12[%c16, %c0_45] : memref<72x512xf32, #tpu.memory_space<vmem>>, vector<2x512xf32>
    tpu.vector_store %arg12[%c16, %c0_45], %107 {strides = array<i32>} : memref<72x512xf32, #tpu.memory_space<vmem>>, vector<2x512xf32>,
    %109 = vector.extract_strided_slice %42 {offsets = [2, 0], sizes = [2, 512], strides = [1, 1]} : vector<8x512xf32> to vector<2x512xf32>
    %c34 = arith.constant 34 : index
    %c0_46 = arith.constant 0 : index
    %110 = vector.load %arg12[%c34, %c0_46] : memref<72x512xf32, #tpu.memory_space<vmem>>, vector<2x512xf32>
    tpu.vector_store %arg12[%c34, %c0_46], %109 {strides = array<i32>} : memref<72x512xf32, #tpu.memory_space<vmem>>, vector<2x512xf32>,
    %111 = vector.extract_strided_slice %42 {offsets = [4, 0], sizes = [2, 512], strides = [1, 1]} : vector<8x512xf32> to vector<2x512xf32>
    %c52 = arith.constant 52 : index
    %c0_47 = arith.constant 0 : index
    %112 = vector.load %arg12[%c52, %c0_47] : memref<72x512xf32, #tpu.memory_space<vmem>>, vector<2x512xf32>
    tpu.vector_store %arg12[%c52, %c0_47], %111 {strides = array<i32>} : memref<72x512xf32, #tpu.memory_space<vmem>>, vector<2x512xf32>,
    %113 = vector.extract_strided_slice %42 {offsets = [6, 0], sizes = [2, 512], strides = [1, 1]} : vector<8x512xf32> to vector<2x512xf32>
    %c70 = arith.constant 70 : index
    %c0_48 = arith.constant 0 : index
    %114 = vector.load %arg12[%c70, %c0_48] : memref<72x512xf32, #tpu.memory_space<vmem>>, vector<2x512xf32>
    tpu.vector_store %arg12[%c70, %c0_48], %113 {strides = array<i32>} : memref<72x512xf32, #tpu.memory_space<vmem>>, vector<2x512xf32>,
    %c0_49 = arith.constant 0 : index
    %c0_50 = arith.constant 0 : index
    %115 = vector.load %arg5[%c0_49, %c0_50] : memref<8x1xf32, #tpu.memory_space<vmem>>, vector<8x1xf32>
    %c0_51 = arith.constant 0 : index
    %c0_52 = arith.constant 0 : index
    %c0_53 = arith.constant 0 : index
    %116 = vector.load %arg4[%c0_51, %c0_52, %c0_53] : memref<4x2x18xf32, #tpu.memory_space<vmem>>, vector<1x2x18xf32>
    %117 = vector.shape_cast %116 : vector<1x2x18xf32> to vector<2x18xf32>
    %c0_54 = arith.constant 0 : index
    %c0_55 = arith.constant 0 : index
    %118 = vector.load %arg12[%c0_54, %c0_55] : memref<72x512xf32, #tpu.memory_space<vmem>>, vector<18x512xf32>
    %cst = arith.constant dense<0.000000e+00> : vector<2x512xf32>
    %119 = tpu.matmul %117, %118, %cst {dimension_numbers = #tpu.dot_dimension_numbers<[1], [0], [0], [1], [0, 0, 1, 1], [], []>} : vector<2x18xf32>, vector<18x512xf32>, vector<2x512xf32> -> vector<2x512xf32>
    %120 = vector.extract_strided_slice %115 {offsets = [0, 0], sizes = [2, 1], strides = [1, 1]} : vector<8x1xf32> to vector<2x1xf32>
    %121 = vector.broadcast %120 : vector<2x1xf32> to vector<2x512xf32>
    %122 = arith.addf %119, %121 : vector<2x512xf32>
    %cst_56 = arith.constant 0.000000e+00 : f32
    %123 = vector.broadcast %cst_56 : f32 to vector<2x512xf32>
    %124 = arith.maximumf %122, %123 : vector<2x512xf32>
    %c0_57 = arith.constant 0 : index
    %c0_58 = arith.constant 0 : index
    %125 = vector.load %arg13[%c0_57, %c0_58] : memref<16x512xf32, #tpu.memory_space<vmem>>, vector<2x512xf32>
    tpu.vector_store %arg13[%c0_57, %c0_58], %124 {strides = array<i32>} : memref<16x512xf32, #tpu.memory_space<vmem>>, vector<2x512xf32>,
    %c1_59 = arith.constant 1 : index
    %c0_60 = arith.constant 0 : index
    %c0_61 = arith.constant 0 : index
    %126 = vector.load %arg4[%c1_59, %c0_60, %c0_61] : memref<4x2x18xf32, #tpu.memory_space<vmem>>, vector<1x2x18xf32>
    %127 = vector.shape_cast %126 : vector<1x2x18xf32> to vector<2x18xf32>
    %c18_62 = arith.constant 18 : index
    %c0_63 = arith.constant 0 : index
    %128 = vector.load %arg12[%c18_62, %c0_63] : memref<72x512xf32, #tpu.memory_space<vmem>>, vector<18x512xf32>
    %cst_64 = arith.constant dense<0.000000e+00> : vector<2x512xf32>
    %129 = tpu.matmul %127, %128, %cst_64 {dimension_numbers = #tpu.dot_dimension_numbers<[1], [0], [0], [1], [0, 0, 1, 1], [], []>} : vector<2x18xf32>, vector<18x512xf32>, vector<2x512xf32> -> vector<2x512xf32>
    %130 = vector.extract_strided_slice %115 {offsets = [2, 0], sizes = [2, 1], strides = [1, 1]} : vector<8x1xf32> to vector<2x1xf32>
    %131 = vector.broadcast %130 : vector<2x1xf32> to vector<2x512xf32>
    %132 = arith.addf %129, %131 : vector<2x512xf32>
    %cst_65 = arith.constant 0.000000e+00 : f32
    %133 = vector.broadcast %cst_65 : f32 to vector<2x512xf32>
    %134 = arith.maximumf %132, %133 : vector<2x512xf32>
    %c2_66 = arith.constant 2 : index
    %c0_67 = arith.constant 0 : index
    %135 = vector.load %arg13[%c2_66, %c0_67] : memref<16x512xf32, #tpu.memory_space<vmem>>, vector<2x512xf32>
    tpu.vector_store %arg13[%c2_66, %c0_67], %134 {strides = array<i32>} : memref<16x512xf32, #tpu.memory_space<vmem>>, vector<2x512xf32>,
    %c2_68 = arith.constant 2 : index
    %c0_69 = arith.constant 0 : index
    %c0_70 = arith.constant 0 : index
    %136 = vector.load %arg4[%c2_68, %c0_69, %c0_70] : memref<4x2x18xf32, #tpu.memory_space<vmem>>, vector<1x2x18xf32>
    %137 = vector.shape_cast %136 : vector<1x2x18xf32> to vector<2x18xf32>
    %c36_71 = arith.constant 36 : index
    %c0_72 = arith.constant 0 : index
    %138 = vector.load %arg12[%c36_71, %c0_72] : memref<72x512xf32, #tpu.memory_space<vmem>>, vector<18x512xf32>
    %cst_73 = arith.constant dense<0.000000e+00> : vector<2x512xf32>
    %139 = tpu.matmul %137, %138, %cst_73 {dimension_numbers = #tpu.dot_dimension_numbers<[1], [0], [0], [1], [0, 0, 1, 1], [], []>} : vector<2x18xf32>, vector<18x512xf32>, vector<2x512xf32> -> vector<2x512xf32>
    %140 = vector.extract_strided_slice %115 {offsets = [4, 0], sizes = [2, 1], strides = [1, 1]} : vector<8x1xf32> to vector<2x1xf32>
    %141 = vector.broadcast %140 : vector<2x1xf32> to vector<2x512xf32>
    %142 = arith.addf %139, %141 : vector<2x512xf32>
    %cst_74 = arith.constant 0.000000e+00 : f32
    %143 = vector.broadcast %cst_74 : f32 to vector<2x512xf32>
    %144 = arith.maximumf %142, %143 : vector<2x512xf32>
    %c4_75 = arith.constant 4 : index
    %c0_76 = arith.constant 0 : index
    %145 = vector.load %arg13[%c4_75, %c0_76] : memref<16x512xf32, #tpu.memory_space<vmem>>, vector<2x512xf32>
    tpu.vector_store %arg13[%c4_75, %c0_76], %144 {strides = array<i32>} : memref<16x512xf32, #tpu.memory_space<vmem>>, vector<2x512xf32>,
    %c3 = arith.constant 3 : index
    %c0_77 = arith.constant 0 : index
    %c0_78 = arith.constant 0 : index
    %146 = vector.load %arg4[%c3, %c0_77, %c0_78] : memref<4x2x18xf32, #tpu.memory_space<vmem>>, vector<1x2x18xf32>
    %147 = vector.shape_cast %146 : vector<1x2x18xf32> to vector<2x18xf32>
    %c54_79 = arith.constant 54 : index
    %c0_80 = arith.constant 0 : index
    %148 = vector.load %arg12[%c54_79, %c0_80] : memref<72x512xf32, #tpu.memory_space<vmem>>, vector<18x512xf32>
    %cst_81 = arith.constant dense<0.000000e+00> : vector<2x512xf32>
    %149 = tpu.matmul %147, %148, %cst_81 {dimension_numbers = #tpu.dot_dimension_numbers<[1], [0], [0], [1], [0, 0, 1, 1], [], []>} : vector<2x18xf32>, vector<18x512xf32>, vector<2x512xf32> -> vector<2x512xf32>
    %150 = vector.extract_strided_slice %115 {offsets = [6, 0], sizes = [2, 1], strides = [1, 1]} : vector<8x1xf32> to vector<2x1xf32>
    %151 = vector.broadcast %150 : vector<2x1xf32> to vector<2x512xf32>
    %152 = arith.addf %149, %151 : vector<2x512xf32>
    %cst_82 = arith.constant 0.000000e+00 : f32
    %153 = vector.broadcast %cst_82 : f32 to vector<2x512xf32>
    %154 = arith.maximumf %152, %153 : vector<2x512xf32>
    %c6_83 = arith.constant 6 : index
    %c0_84 = arith.constant 0 : index
    %155 = vector.load %arg13[%c6_83, %c0_84] : memref<16x512xf32, #tpu.memory_space<vmem>>, vector<2x512xf32>
    tpu.vector_store %arg13[%c6_83, %c0_84], %154 {strides = array<i32>} : memref<16x512xf32, #tpu.memory_space<vmem>>, vector<2x512xf32>,
    %c8_85 = arith.constant 8 : index
    %c0_86 = arith.constant 0 : index
    %156 = vector.load %arg13[%c8_85, %c0_86] : memref<16x512xf32, #tpu.memory_space<vmem>>, vector<8x512xf32>
    tpu.vector_store %arg13[%c8_85, %c0_86], %30 {strides = array<i32>} : memref<16x512xf32, #tpu.memory_space<vmem>>, vector<8x512xf32>,
    %c0_87 = arith.constant 0 : index
    %c0_88 = arith.constant 0 : index
    %157 = vector.load %arg6[%c0_87, %c0_88] : memref<8x8xf32, #tpu.memory_space<vmem>>, vector<8x8xf32>
    %cst_89 = arith.constant dense<0.000000e+00> : vector<8x512xf32>
    %158 = tpu.matmul %157, %30, %cst_89 {dimension_numbers = #tpu.dot_dimension_numbers<[1], [0], [0], [1], [0, 0, 1, 1], [], []>} : vector<8x8xf32>, vector<8x512xf32>, vector<8x512xf32> -> vector<8x512xf32>
    %c0_90 = arith.constant 0 : index
    %c0_91 = arith.constant 0 : index
    %159 = vector.load %arg7[%c0_90, %c0_91] : memref<8x1xf32, #tpu.memory_space<vmem>>, vector<8x1xf32>
    %160 = vector.broadcast %159 : vector<8x1xf32> to vector<8x512xf32>
    %161 = arith.addf %158, %160 : vector<8x512xf32>
    %c0_92 = arith.constant 0 : index
    %c0_93 = arith.constant 0 : index
    %162 = vector.load %arg8[%c0_92, %c0_93] : memref<4x16xf32, #tpu.memory_space<vmem>>, vector<4x16xf32>
    %c0_94 = arith.constant 0 : index
    %c0_95 = arith.constant 0 : index
    %163 = vector.load %arg13[%c0_94, %c0_95] : memref<16x512xf32, #tpu.memory_space<vmem>>, vector<16x512xf32>
    %cst_96 = arith.constant dense<0.000000e+00> : vector<4x512xf32>
    %164 = tpu.matmul %162, %163, %cst_96 {dimension_numbers = #tpu.dot_dimension_numbers<[1], [0], [0], [1], [0, 0, 1, 1], [], []>} : vector<4x16xf32>, vector<16x512xf32>, vector<4x512xf32> -> vector<4x512xf32>
    %c0_97 = arith.constant 0 : index
    %c0_98 = arith.constant 0 : index
    %165 = vector.load %arg9[%c0_97, %c0_98] : memref<4x1xf32, #tpu.memory_space<vmem>>, vector<4x1xf32>
    %166 = vector.broadcast %165 : vector<4x1xf32> to vector<4x512xf32>
    %167 = arith.addf %164, %166 : vector<4x512xf32>
    %cst_99 = arith.constant 0.000000e+00 : f32
    %168 = vector.broadcast %cst_99 : f32 to vector<4x512xf32>
    %169 = arith.maximumf %167, %168 : vector<4x512xf32>
    %c0_100 = arith.constant 0 : index
    %c0_101 = arith.constant 0 : index
    %170 = vector.load %arg10[%c0_100, %c0_101] : memref<8x4xf32, #tpu.memory_space<vmem>>, vector<8x4xf32>
    %cst_102 = arith.constant dense<0.000000e+00> : vector<8x512xf32>
    %171 = tpu.matmul %170, %169, %cst_102 {dimension_numbers = #tpu.dot_dimension_numbers<[1], [0], [0], [1], [0, 0, 1, 1], [], []>} : vector<8x4xf32>, vector<4x512xf32>, vector<8x512xf32> -> vector<8x512xf32>
    %c0_103 = arith.constant 0 : index
    %c0_104 = arith.constant 0 : index
    %172 = vector.load %arg13[%c0_103, %c0_104] : memref<16x512xf32, #tpu.memory_space<vmem>>, vector<8x512xf32>
    %173 = vector.extract_strided_slice %171 {offsets = [0, 0], sizes = [8, 256], strides = [1, 1]} : vector<8x512xf32> to vector<8x256xf32>
    %cst_105 = arith.constant dense<0xFF800000> : vector<8xf32>
    %174 = vector.multi_reduction <maximumf>, %173, %cst_105 [1] : vector<8x256xf32> to vector<8xf32>
    %175 = vector.shape_cast %174 : vector<8xf32> to vector<8x1xf32>
    %176 = vector.broadcast %175 : vector<8x1xf32> to vector<8x256xf32>
    %177 = arith.subf %173, %176 : vector<8x256xf32>
    %178 = math.exp %177 : vector<8x256xf32>
    %cst_106 = arith.constant dense<0.000000e+00> : vector<8xf32>
    %179 = vector.multi_reduction <add>, %178, %cst_106 [1] : vector<8x256xf32> to vector<8xf32>
    %180 = vector.shape_cast %179 : vector<8xf32> to vector<8x1xf32>
    %181 = vector.broadcast %180 : vector<8x1xf32> to vector<8x256xf32>
    %182 = arith.divf %178, %181 : vector<8x256xf32>
    %183 = vector.extract_strided_slice %161 {offsets = [0, 0], sizes = [8, 256], strides = [1, 1]} : vector<8x512xf32> to vector<8x256xf32>
    %184 = arith.mulf %182, %183 : vector<8x256xf32>
    %185 = vector.extract_strided_slice %172 {offsets = [0, 0], sizes = [8, 256], strides = [1, 1]} : vector<8x512xf32> to vector<8x256xf32>
    %186 = arith.addf %185, %184 : vector<8x256xf32>
    %c0_107 = arith.constant 0 : index
    %c0_108 = arith.constant 0 : index
    %c0_109 = arith.constant 0 : index
    %187 = vector.load %arg11[%c0_107, %c0_108, %c0_109] : memref<2x8x256xf32, #tpu.memory_space<vmem>>, vector<1x8x256xf32>
    %188 = vector.shape_cast %187 : vector<1x8x256xf32> to vector<8x256xf32>
    %189 = vector.shape_cast %186 : vector<8x256xf32> to vector<1x8x256xf32>
    tpu.vector_store %arg11[%c0_107, %c0_108, %c0_109], %189 {strides = array<i32>} : memref<2x8x256xf32, #tpu.memory_space<vmem>>, vector<1x8x256xf32>,
    %190 = vector.extract_strided_slice %171 {offsets = [0, 256], sizes = [8, 256], strides = [1, 1]} : vector<8x512xf32> to vector<8x256xf32>
    %cst_110 = arith.constant dense<0xFF800000> : vector<8xf32>
    %191 = vector.multi_reduction <maximumf>, %190, %cst_110 [1] : vector<8x256xf32> to vector<8xf32>
    %192 = vector.shape_cast %191 : vector<8xf32> to vector<8x1xf32>
    %193 = vector.broadcast %192 : vector<8x1xf32> to vector<8x256xf32>
    %194 = arith.subf %190, %193 : vector<8x256xf32>
    %195 = math.exp %194 : vector<8x256xf32>
    %cst_111 = arith.constant dense<0.000000e+00> : vector<8xf32>
    %196 = vector.multi_reduction <add>, %195, %cst_111 [1] : vector<8x256xf32> to vector<8xf32>
    %197 = vector.shape_cast %196 : vector<8xf32> to vector<8x1xf32>
    %198 = vector.broadcast %197 : vector<8x1xf32> to vector<8x256xf32>
    %199 = arith.divf %195, %198 : vector<8x256xf32>
    %200 = vector.extract_strided_slice %161 {offsets = [0, 256], sizes = [8, 256], strides = [1, 1]} : vector<8x512xf32> to vector<8x256xf32>
    %201 = arith.mulf %199, %200 : vector<8x256xf32>
    %202 = vector.extract_strided_slice %172 {offsets = [0, 256], sizes = [8, 256], strides = [1, 1]} : vector<8x512xf32> to vector<8x256xf32>
    %203 = arith.addf %202, %201 : vector<8x256xf32>
    %c1_112 = arith.constant 1 : index
    %c0_113 = arith.constant 0 : index
    %c0_114 = arith.constant 0 : index
    %204 = vector.load %arg11[%c1_112, %c0_113, %c0_114] : memref<2x8x256xf32, #tpu.memory_space<vmem>>, vector<1x8x256xf32>
    %205 = vector.shape_cast %204 : vector<1x8x256xf32> to vector<8x256xf32>
    %206 = vector.shape_cast %203 : vector<8x256xf32> to vector<1x8x256xf32>
    tpu.vector_store %arg11[%c1_112, %c0_113, %c0_114], %206 {strides = array<i32>} : memref<2x8x256xf32, #tpu.memory_space<vmem>>, vector<1x8x256xf32>,
    return
  }
  func.func @transform_0(%arg0: i32) -> (i32, i32, i32) {
    %c0_i32 = arith.constant 0 : i32
    %c0_i32_0 = arith.constant 0 : i32
    %c0_i32_1 = arith.constant 0 : i32
    return %arg0, %c0_i32, %c0_i32_0 : i32, i32, i32
  }
  func.func @transform_1(%arg0: i32) -> (i32, i32) {
    %c0_i32 = arith.constant 0 : i32
    %c0_i32_0 = arith.constant 0 : i32
    %c0_i32_1 = arith.constant 0 : i32
    return %c0_i32, %c0_i32_0 : i32, i32
  }
  func.func @transform_2(%arg0: i32) -> (i32, i32) {
    %c0_i32 = arith.constant 0 : i32
    %c0_i32_0 = arith.constant 0 : i32
    %c0_i32_1 = arith.constant 0 : i32
    return %c0_i32, %c0_i32_0 : i32, i32
  }
  func.func @transform_3(%arg0: i32) -> (i32, i32, i32) {
    %c0_i32 = arith.constant 0 : i32
    %c0_i32_0 = arith.constant 0 : i32
    %c0_i32_1 = arith.constant 0 : i32
    %c0_i32_2 = arith.constant 0 : i32
    return %c0_i32, %c0_i32_0, %c0_i32_1 : i32, i32, i32
  }
  func.func @transform_4(%arg0: i32) -> (i32, i32) {
    %c0_i32 = arith.constant 0 : i32
    %c0_i32_0 = arith.constant 0 : i32
    %c0_i32_1 = arith.constant 0 : i32
    return %c0_i32, %c0_i32_0 : i32, i32
  }
  func.func @transform_5(%arg0: i32) -> (i32, i32) {
    %c0_i32 = arith.constant 0 : i32
    %c0_i32_0 = arith.constant 0 : i32
    %c0_i32_1 = arith.constant 0 : i32
    return %c0_i32, %c0_i32_0 : i32, i32
  }
  func.func @transform_6(%arg0: i32) -> (i32, i32) {
    %c0_i32 = arith.constant 0 : i32
    %c0_i32_0 = arith.constant 0 : i32
    %c0_i32_1 = arith.constant 0 : i32
    return %c0_i32, %c0_i32_0 : i32, i32
  }
  func.func @transform_7(%arg0: i32) -> (i32, i32) {
    %c0_i32 = arith.constant 0 : i32
    %c0_i32_0 = arith.constant 0 : i32
    %c0_i32_1 = arith.constant 0 : i32
    return %c0_i32, %c0_i32_0 : i32, i32
  }
  func.func @transform_8(%arg0: i32) -> (i32, i32) {
    %c0_i32 = arith.constant 0 : i32
    %c0_i32_0 = arith.constant 0 : i32
    %c0_i32_1 = arith.constant 0 : i32
    return %c0_i32, %c0_i32_0 : i32, i32
  }
  func.func @transform_9(%arg0: i32) -> (i32, i32) {
    %c0_i32 = arith.constant 0 : i32
    %c0_i32_0 = arith.constant 0 : i32
    %c0_i32_1 = arith.constant 0 : i32
    return %c0_i32, %c0_i32_0 : i32, i32
  }
  func.func @transform_10(%arg0: i32) -> (i32, i32, i32) {
    %c0_i32 = arith.constant 0 : i32
    %c0_i32_0 = arith.constant 0 : i32
    %c0_i32_1 = arith.constant 0 : i32
    return %arg0, %c0_i32, %c0_i32_0 : i32, i32, i32
  }
}

</mosaic_0001>

<llo_original>
// kernel: tpu_custom_call.1
$region0: #{tpu_custom_call.1}
  #allocation0 [shape = 'u32[]', space=smem, size = 0x4, offset = 0x4, fixed_abs, tag = 'smem constant byte address 0x4 - core index']
  #allocation1 [shape = 'u32[72,128]{1,0:T(1,128)}', space=vmem, size = 0x9000, scoped, tag = 'internal scratch']
  #allocation2 [shape = 'f32[72,512]{1,0:T(8,128)}', space=vmem, size = 0x24000, scoped, tag = 'scratch operand']
  #allocation3 [shape = 'f32[16,512]{1,0:T(8,128)}', space=vmem, size = 0x8000, scoped, tag = 'scratch operand']
  %s0 = inlined_call_operand.hbm [shape: f32[4,8,290], index: 0, kind: input, shape index: {}]
  %s1 = inlined_call_operand.vmem [shape: f32[1,290], index: 1, kind: input, shape index: {}]
  %s2 = inlined_call_operand.vmem [shape: f32[1,290], index: 2, kind: input, shape index: {}]
  %s3 = inlined_call_operand.vmem [shape: f32[4,2,18], index: 3, kind: input, shape index: {}]
  %s4 = inlined_call_operand.vmem [shape: f32[8,1], index: 4, kind: input, shape index: {}]
  %s5 = inlined_call_operand.vmem [shape: f32[8,8], index: 5, kind: input, shape index: {}]
  %s6 = inlined_call_operand.vmem [shape: f32[8,1], index: 6, kind: input, shape index: {}]
  %s7 = inlined_call_operand.vmem [shape: f32[4,16], index: 7, kind: input, shape index: {}]
  %s8 = inlined_call_operand.vmem [shape: f32[4,1], index: 8, kind: input, shape index: {}]
  %s9 = inlined_call_operand.vmem [shape: f32[8,4], index: 9, kind: input, shape index: {}]
  %s10 = inlined_call_operand.hbm [shape: f32[4,8,256], index: 10, kind: output, shape index: {}]
  %s11 = sld [smem:[#allocation0]]
  $region77: #{tpu_custom_call.1} parent=0
    _
  %s13 = ssub.s32 1, %s11
  %s14 = scalar_select 0, %s13, %s11
  $region1: #{tpu_custom_call.1} parent=0
    #allocation4 [shape = 'u8[49152]{0}', space=vmem, size = 0xc000, scoped, tag = 'input window, operand 0']
    #allocation5 [shape = 's32[2]{0}', space=sflag, size = 0x8, scoped, tag = 'scoped memory for tpu_custom_call.1']
    #allocation6 [shape = 's32[2]{0}', space=sflag, size = 0x8, scoped, tag = 'scoped memory for tpu_custom_call.1']
    #allocation7 [shape = 'u8[32768]{0}', space=vmem, size = 0x8000, scoped, tag = 'output window, operand 0']
    %15 = vsyncpa [#allocation5], 0
    %s16 = scalar_lea.sflag [#allocation5], 1
    %17 = vsyncpa %s16, 0
    %18 = vsyncpa [#allocation6], 0
    %s19 = scalar_lea.sflag [#allocation6], 1
    %20 = vsyncpa %s19, 0
    loop: start=0, step=1, limit=4
    $region2: #{tpu_custom_call.1} parent=1 // loop_pre_header
      _
    $region3: #{tpu_custom_call.1} parent=1 // loop_header
      %s22 = sphi 0, %s26
      %p23 = scmp.ge.s32.totalorder %s22, 4
      %s32 = sphi 0, %s34
      %s35 = sphi 0, %s32
      %s36 = sphi 0, %s35
      %s52 = sphi 0, %s36
      %s56 = sphi 0, %s56
      %s58 = sphi 0, %s56
      %s59 = sphi 0, %s58
      %s73 = sphi 0, %s59
      %s77 = sphi 0, %s77
      %s79 = sphi 0, %s77
      %s80 = sphi 0, %s79
      %s94 = sphi 0, %s80
      %s98 = sphi 0, %s98
      %s100 = sphi 0, %s98
      %s101 = sphi 0, %s100
      %s115 = sphi 0, %s101
      %s119 = sphi 0, %s119
      %s121 = sphi 0, %s119
      %s122 = sphi 0, %s121
      %s136 = sphi 0, %s122
      %s140 = sphi 0, %s140
      %s142 = sphi 0, %s140
      %s143 = sphi 0, %s142
      %s157 = sphi 0, %s143
      %s161 = sphi 0, %s161
      %s163 = sphi 0, %s161
      %s164 = sphi 0, %s163
      %s178 = sphi 0, %s164
      %s182 = sphi 0, %s182
      %s184 = sphi 0, %s182
      %s185 = sphi 0, %s184
      %s199 = sphi 0, %s185
      %s203 = sphi 0, %s203
      %s205 = sphi 0, %s203
      %s206 = sphi 0, %s205
      %s220 = sphi 0, %s206
      %s224 = sphi 0, %s224
      %s226 = sphi 0, %s224
      %s227 = sphi 0, %s226
      %s241 = sphi 0, %s227
      %s247 = sphi 0, %s249
      %s250 = sphi 0, %s247
      %s251 = sphi 0, %s250
      %s267 = sphi 0, %s251
    $region4: #{tpu_custom_call.1} parent=1 // loop_header_branch
      %25 = sbr.rel (%p23) target = $region8
    $region5: #{tpu_custom_call.1} parent=1 // loop_body
      %s27 = ssub.s32 %s22, 1
      %s28 = ssub.s32 %s22, 2
      %s29 = sadd.s32 %s22, 1
      %s30 = ssub.s32 %s22, %s29
      %p31 = scmp.eq.s32.totalorder %s30, 0
      %s33 = sadd.s32 %s32, 1
      %s34 = scalar_select %p31, %s32, %s33
      %p37 = pneg %p31
      %p38 = scmp.eq.s32.totalorder %s22, 1
      %p39 = por %p37, %p38
      %p40 = scmp.ne.s32.totalorder %s32, %s35
      %p41 = scmp.eq.s32.totalorder %s22, 0
      %p42 = por %p40, %p41
      %p43 = scmp.ne.s32.totalorder %s32, %s35
      %p44 = scmp.eq.s32.totalorder %s27, 1
      %p45 = por %p43, %p44
      %p46 = scmp.ne.s32.totalorder %s35, %s36
      %p47 = scmp.eq.s32.totalorder %s27, 0
      %p48 = por %p46, %p47
      %p49 = scmp.ne.s32.totalorder %s35, %s36
      %p50 = scmp.eq.s32.totalorder %s28, 1
      %p51 = por %p49, %p50
      %p53 = scmp.ne.s32.totalorder %s36, %s52
      %p54 = scmp.eq.s32.totalorder %s28, 0
      %p55 = por %p53, %p54
      %s57 = sadd.s32 %s56, 1
      %p60 = scmp.eq.s32.totalorder %s22, 1
      %p61 = scmp.ne.s32.totalorder %s56, %s58
      %p62 = scmp.eq.s32.totalorder %s22, 0
      %p63 = por %p61, %p62
      %p64 = scmp.ne.s32.totalorder %s56, %s58
      %p65 = scmp.eq.s32.totalorder %s27, 1
      %p66 = por %p64, %p65
      %p67 = scmp.ne.s32.totalorder %s58, %s59
      %p68 = scmp.eq.s32.totalorder %s27, 0
      %p69 = por %p67, %p68
      %p70 = scmp.ne.s32.totalorder %s58, %s59
      %p71 = scmp.eq.s32.totalorder %s28, 1
      %p72 = por %p70, %p71
      %p74 = scmp.ne.s32.totalorder %s59, %s73
      %p75 = scmp.eq.s32.totalorder %s28, 0
      %p76 = por %p74, %p75
      %s78 = sadd.s32 %s77, 1
      %p81 = scmp.eq.s32.totalorder %s22, 1
      %p82 = scmp.ne.s32.totalorder %s77, %s79
      %p83 = scmp.eq.s32.totalorder %s22, 0
      %p84 = por %p82, %p83
      %p85 = scmp.ne.s32.totalorder %s77, %s79
      %p86 = scmp.eq.s32.totalorder %s27, 1
      %p87 = por %p85, %p86
      %p88 = scmp.ne.s32.totalorder %s79, %s80
      %p89 = scmp.eq.s32.totalorder %s27, 0
      %p90 = por %p88, %p89
      %p91 = scmp.ne.s32.totalorder %s79, %s80
      %p92 = scmp.eq.s32.totalorder %s28, 1
      %p93 = por %p91, %p92
      %p95 = scmp.ne.s32.totalorder %s80, %s94
      %p96 = scmp.eq.s32.totalorder %s28, 0
      %p97 = por %p95, %p96
      %s99 = sadd.s32 %s98, 1
      %p102 = scmp.eq.s32.totalorder %s22, 1
      %p103 = scmp.ne.s32.totalorder %s98, %s100
      %p104 = scmp.eq.s32.totalorder %s22, 0
      %p105 = por %p103, %p104
      %p106 = scmp.ne.s32.totalorder %s98, %s100
      %p107 = scmp.eq.s32.totalorder %s27, 1
      %p108 = por %p106, %p107
      %p109 = scmp.ne.s32.totalorder %s100, %s101
      %p110 = scmp.eq.s32.totalorder %s27, 0
      %p111 = por %p109, %p110
      %p112 = scmp.ne.s32.totalorder %s100, %s101
      %p113 = scmp.eq.s32.totalorder %s28, 1
      %p114 = por %p112, %p113
      %p116 = scmp.ne.s32.totalorder %s101, %s115
      %p117 = scmp.eq.s32.totalorder %s28, 0
      %p118 = por %p116, %p117
      %s120 = sadd.s32 %s119, 1
      %p123 = scmp.eq.s32.totalorder %s22, 1
      %p124 = scmp.ne.s32.totalorder %s119, %s121
      %p125 = scmp.eq.s32.totalorder %s22, 0
      %p126 = por %p124, %p125
      %p127 = scmp.ne.s32.totalorder %s119, %s121
      %p128 = scmp.eq.s32.totalorder %s27, 1
      %p129 = por %p127, %p128
      %p130 = scmp.ne.s32.totalorder %s121, %s122
      %p131 = scmp.eq.s32.totalorder %s27, 0
      %p132 = por %p130, %p131
      %p133 = scmp.ne.s32.totalorder %s121, %s122
      %p134 = scmp.eq.s32.totalorder %s28, 1
      %p135 = por %p133, %p134
      %p137 = scmp.ne.s32.totalorder %s122, %s136
      %p138 = scmp.eq.s32.totalorder %s28, 0
      %p139 = por %p137, %p138
      %s141 = sadd.s32 %s140, 1
      %p144 = scmp.eq.s32.totalorder %s22, 1
      %p145 = scmp.ne.s32.totalorder %s140, %s142
      %p146 = scmp.eq.s32.totalorder %s22, 0
      %p147 = por %p145, %p146
      %p148 = scmp.ne.s32.totalorder %s140, %s142
      %p149 = scmp.eq.s32.totalorder %s27, 1
      %p150 = por %p148, %p149
      %p151 = scmp.ne.s32.totalorder %s142, %s143
      %p152 = scmp.eq.s32.totalorder %s27, 0
      %p153 = por %p151, %p152
      %p154 = scmp.ne.s32.totalorder %s142, %s143
      %p155 = scmp.eq.s32.totalorder %s28, 1
      %p156 = por %p154, %p155
      %p158 = scmp.ne.s32.totalorder %s143, %s157
      %p159 = scmp.eq.s32.totalorder %s28, 0
      %p160 = por %p158, %p159
      %s162 = sadd.s32 %s161, 1
      %p165 = scmp.eq.s32.totalorder %s22, 1
      %p166 = scmp.ne.s32.totalorder %s161, %s163
      %p167 = scmp.eq.s32.totalorder %s22, 0
      %p168 = por %p166, %p167
      %p169 = scmp.ne.s32.totalorder %s161, %s163
      %p170 = scmp.eq.s32.totalorder %s27, 1
      %p171 = por %p169, %p170
      %p172 = scmp.ne.s32.totalorder %s163, %s164
      %p173 = scmp.eq.s32.totalorder %s27, 0
      %p174 = por %p172, %p173
      %p175 = scmp.ne.s32.totalorder %s163, %s164
      %p176 = scmp.eq.s32.totalorder %s28, 1
      %p177 = por %p175, %p176
      %p179 = scmp.ne.s32.totalorder %s164, %s178
      %p180 = scmp.eq.s32.totalorder %s28, 0
      %p181 = por %p179, %p180
      %s183 = sadd.s32 %s182, 1
      %p186 = scmp.eq.s32.totalorder %s22, 1
      %p187 = scmp.ne.s32.totalorder %s182, %s184
      %p188 = scmp.eq.s32.totalorder %s22, 0
      %p189 = por %p187, %p188
      %p190 = scmp.ne.s32.totalorder %s182, %s184
      %p191 = scmp.eq.s32.totalorder %s27, 1
      %p192 = por %p190, %p191
      %p193 = scmp.ne.s32.totalorder %s184, %s185
      %p194 = scmp.eq.s32.totalorder %s27, 0
      %p195 = por %p193, %p194
      %p196 = scmp.ne.s32.totalorder %s184, %s185
      %p197 = scmp.eq.s32.totalorder %s28, 1
      %p198 = por %p196, %p197
      %p200 = scmp.ne.s32.totalorder %s185, %s199
      %p201 = scmp.eq.s32.totalorder %s28, 0
      %p202 = por %p200, %p201
      %s204 = sadd.s32 %s203, 1
      %p207 = scmp.eq.s32.totalorder %s22, 1
      %p208 = scmp.ne.s32.totalorder %s203, %s205
      %p209 = scmp.eq.s32.totalorder %s22, 0
      %p210 = por %p208, %p209
      %p211 = scmp.ne.s32.totalorder %s203, %s205
      %p212 = scmp.eq.s32.totalorder %s27, 1
      %p213 = por %p211, %p212
      %p214 = scmp.ne.s32.totalorder %s205, %s206
      %p215 = scmp.eq.s32.totalorder %s27, 0
      %p216 = por %p214, %p215
      %p217 = scmp.ne.s32.totalorder %s205, %s206
      %p218 = scmp.eq.s32.totalorder %s28, 1
      %p219 = por %p217, %p218
      %p221 = scmp.ne.s32.totalorder %s206, %s220
      %p222 = scmp.eq.s32.totalorder %s28, 0
      %p223 = por %p221, %p222
      %s225 = sadd.s32 %s224, 1
      %p228 = scmp.eq.s32.totalorder %s22, 1
      %p229 = scmp.ne.s32.totalorder %s224, %s226
      %p230 = scmp.eq.s32.totalorder %s22, 0
      %p231 = por %p229, %p230
      %p232 = scmp.ne.s32.totalorder %s224, %s226
      %p233 = scmp.eq.s32.totalorder %s27, 1
      %p234 = por %p232, %p233
      %p235 = scmp.ne.s32.totalorder %s226, %s227
      %p236 = scmp.eq.s32.totalorder %s27, 0
      %p237 = por %p235, %p236
      %p238 = scmp.ne.s32.totalorder %s226, %s227
      %p239 = scmp.eq.s32.totalorder %s28, 1
      %p240 = por %p238, %p239
      %p242 = scmp.ne.s32.totalorder %s227, %s241
      %p243 = scmp.eq.s32.totalorder %s28, 0
      %p244 = por %p242, %p243
      %s245 = ssub.s32 %s22, %s29
      %p246 = scmp.eq.s32.totalorder %s245, 0
      %s248 = sadd.s32 %s247, 1
      %s249 = scalar_select %p246, %s247, %s248
      %p252 = pneg %p246
      %p253 = scmp.eq.s32.totalorder %s22, 1
      %p254 = por %p252, %p253
      %p255 = scmp.ne.s32.totalorder %s247, %s250
      %p256 = scmp.eq.s32.totalorder %s22, 0
      %p257 = por %p255, %p256
      %p258 = scmp.ne.s32.totalorder %s247, %s250
      %p259 = scmp.eq.s32.totalorder %s27, 1
      %p260 = por %p258, %p259
      %p261 = scmp.ne.s32.totalorder %s250, %s251
      %p262 = scmp.eq.s32.totalorder %s27, 0
      %p263 = por %p261, %p262
      %p264 = scmp.ne.s32.totalorder %s250, %s251
      %p265 = scmp.eq.s32.totalorder %s28, 1
      %p266 = por %p264, %p265
      %p268 = scmp.ne.s32.totalorder %s251, %s267
      %p269 = scmp.eq.s32.totalorder %s28, 0
      %p270 = por %p268, %p269
      %p271 = scmp.le.s32.totalorder 1, %s22
      %p272 = scmp.lt.s32.totalorder %s22, 3
      %p273 = pnand %p271, %p272
      %p274 = pneg %p273
      // Predicated region
      $region9: #{tpu_custom_call.1} parent=5 // pred_check
        _
      $region10: #{tpu_custom_call.1} parent=5 // pred_check_branch
        %276 = sbr.rel (%p273) target = $region12
      $region11: #{tpu_custom_call.1} parent=5 // pred_region
        %s277 = ssub.s32 %s22, 1
        // Predicated region
        $region13: #{tpu_custom_call.1} parent=11 // pred_check
          %p278 = pneg %p69
        $region14: #{tpu_custom_call.1} parent=11 // pred_check_branch
          %280 = sbr.rel (%p278) target = $region16
        $region15: #{tpu_custom_call.1} parent=11 // pred_region
          _
        $region16: #{tpu_custom_call.1} parent=11 // pred_fallthru
          _
        // Predicated region
        $region17: #{tpu_custom_call.1} parent=11 // pred_check
          %p281 = pneg %p90
        $region18: #{tpu_custom_call.1} parent=11 // pred_check_branch
          %283 = sbr.rel (%p281) target = $region20
        $region19: #{tpu_custom_call.1} parent=11 // pred_region
          _
        $region20: #{tpu_custom_call.1} parent=11 // pred_fallthru
          _
        // Predicated region
        $region21: #{tpu_custom_call.1} parent=11 // pred_check
          %p284 = pneg %p111
        $region22: #{tpu_custom_call.1} parent=11 // pred_check_branch
          %286 = sbr.rel (%p284) target = $region24
        $region23: #{tpu_custom_call.1} parent=11 // pred_region
          _
        $region24: #{tpu_custom_call.1} parent=11 // pred_fallthru
          _
        // Predicated region
        $region25: #{tpu_custom_call.1} parent=11 // pred_check
          %p287 = pneg %p132
        $region26: #{tpu_custom_call.1} parent=11 // pred_check_branch
          %289 = sbr.rel (%p287) target = $region28
        $region27: #{tpu_custom_call.1} parent=11 // pred_region
          _
        $region28: #{tpu_custom_call.1} parent=11 // pred_fallthru
          _
        // Predicated region
        $region29: #{tpu_custom_call.1} parent=11 // pred_check
          %p290 = pneg %p153
        $region30: #{tpu_custom_call.1} parent=11 // pred_check_branch
          %292 = sbr.rel (%p290) target = $region32
        $region31: #{tpu_custom_call.1} parent=11 // pred_region
          _
        $region32: #{tpu_custom_call.1} parent=11 // pred_fallthru
          _
        // Predicated region
        $region33: #{tpu_custom_call.1} parent=11 // pred_check
          %p293 = pneg %p174
        $region34: #{tpu_custom_call.1} parent=11 // pred_check_branch
          %295 = sbr.rel (%p293) target = $region36
        $region35: #{tpu_custom_call.1} parent=11 // pred_region
          _
        $region36: #{tpu_custom_call.1} parent=11 // pred_fallthru
          _
        // Predicated region
        $region37: #{tpu_custom_call.1} parent=11 // pred_check
          %p296 = pneg %p195
        $region38: #{tpu_custom_call.1} parent=11 // pred_check_branch
          %298 = sbr.rel (%p296) target = $region40
        $region39: #{tpu_custom_call.1} parent=11 // pred_region
          _
        $region40: #{tpu_custom_call.1} parent=11 // pred_fallthru
          _
        // Predicated region
        $region41: #{tpu_custom_call.1} parent=11 // pred_check
          %p299 = pneg %p216
        $region42: #{tpu_custom_call.1} parent=11 // pred_check_branch
          %301 = sbr.rel (%p299) target = $region44
        $region43: #{tpu_custom_call.1} parent=11 // pred_region
          _
        $region44: #{tpu_custom_call.1} parent=11 // pred_fallthru
          _
        // Predicated region
        $region45: #{tpu_custom_call.1} parent=11 // pred_check
          %p302 = pneg %p237
        $region46: #{tpu_custom_call.1} parent=11 // pred_check_branch
          %304 = sbr.rel (%p302) target = $region48
        $region47: #{tpu_custom_call.1} parent=11 // pred_region
          _
        $region48: #{tpu_custom_call.1} parent=11 // pred_fallthru
          _
      $region12: #{tpu_custom_call.1} parent=5 // pred_fallthru
        _
      %p305 = scmp.lt.s32.totalorder %s22, 2
      // Predicated region
      $region49: #{tpu_custom_call.1} parent=5 // pred_check
        %p306 = pneg %p305
      $region50: #{tpu_custom_call.1} parent=5 // pred_check_branch
        %308 = sbr.rel (%p306) target = $region52
      $region51: #{tpu_custom_call.1} parent=5 // pred_region
        // Predicated region
        $region53: #{tpu_custom_call.1} parent=51 // pred_check
          %p309 = pneg %p42
        $region54: #{tpu_custom_call.1} parent=51 // pred_check_branch
          %311 = sbr.rel (%p309) target = $region56
        $region55: #{tpu_custom_call.1} parent=51 // pred_region
          %s312 = sand.u32 %s32, 1
          %s313 = scalar_lea.sflag [#allocation5], %s312
          %s314 = sand.u32 %s32, 1
          %s315 = smul.addr %s314, 48
          %s316 = scalar_lea.vmem [#allocation4], %s315
          %s317 = smul.u32 2, %s22
          %319 = vsyncadd %s313, 0
          %s320 = smul.addr %s317, 3
          %s321 = smul.addr %s320, 8
          %s322 = scalar_lea.hbm %s0, %s321
          %s323 = sshll.u32 %s322, 4
          %s324 = int_to_ptr.hbm [resolvable:$true] %s323
          %s325 = sshll.u32 %s316, 4
          %s326 = int_to_ptr.vmem [resolvable:$true] %s325
          %331 = dma.hbm_to_vmem [thread:$0]  %s324, 768, %s326, %s313, 384, 384, 24
        $region56: #{tpu_custom_call.1} parent=51 // pred_fallthru
          _
      $region52: #{tpu_custom_call.1} parent=5 // pred_fallthru
        _
      %p332 = scmp.le.s32.totalorder 1, %s22
      %p333 = scmp.lt.s32.totalorder %s22, 3
      %p334 = pnand %p332, %p333
      %p335 = pneg %p334
      // Predicated region
      $region57: #{tpu_custom_call.1} parent=5 // pred_check
        _
      $region58: #{tpu_custom_call.1} parent=5 // pred_check_branch
        %337 = sbr.rel (%p334) target = $region60
      $region59: #{tpu_custom_call.1} parent=5 // pred_region
        %s338 = ssub.s32 %s22, 1
        %s339 = sand.u32 %s35, 1
        %s340 = scalar_lea.sflag [#allocation5], %s339
        %s341 = sand.u32 %s35, 1
        %s342 = smul.addr %s341, 48
        %s343 = scalar_lea.vmem [#allocation4], %s342
        // Predicated region
        $region61: #{tpu_custom_call.1} parent=59 // pred_check
          %p344 = pneg %p48
        $region62: #{tpu_custom_call.1} parent=59 // pred_check_branch
          %346 = sbr.rel (%p344) target = $region64
        $region63: #{tpu_custom_call.1} parent=59 // pred_region
          %348 = dma.done %s340, 768
        $region64: #{tpu_custom_call.1} parent=59 // pred_fallthru
          _
        %s349 = sand.u32 %s35, 1
        %s350 = scalar_lea.sflag [#allocation5], %s349
        %s351 = sand.u32 %s35, 1
        %s352 = smul.addr %s351, 48
        %s353 = scalar_lea.vmem [#allocation4], %s352
        %p354 = pneg %p48
        %p355 = pneg %p45
        %p356 = pneg %p69
        %p357 = pneg %p66
        %p358 = pneg %p90
        %p359 = pneg %p87
        %p360 = pneg %p111
        %p361 = pneg %p108
        %p362 = pneg %p132
        %p363 = pneg %p129
        %p364 = pneg %p153
        %p365 = pneg %p150
        %p366 = pneg %p174
        %p367 = pneg %p171
        %p368 = pneg %p195
        %p369 = pneg %p192
        %p370 = pneg %p216
        %p371 = pneg %p213
        %p372 = pneg %p237
        %p373 = pneg %p234
        %p374 = pneg %p263
        %p375 = pneg %p260
        %s376 = sand.u32 %s250, 1
        %s377 = scalar_lea.sflag [#allocation6], %s376
        %s378 = sand.u32 %s250, 1
        %s379 = smul.addr %s378, 32
        %s380 = scalar_lea.vmem [#allocation7], %s379
        %s381 = smul.u32 2, %s27
        %s382 = smul.u32 2, %s27
        %v383 = vld [vmem:[%s343] sm:$0xff]
        %v384 = vld [vmem:[%s343 + $0x8] sm:$0xff]
        %v385 = vld [vmem:[%s343 + $0x10] sm:$0xff]
        %s386 = scalar_lea.vmem %s343, 24 [#allocation4]
        %v387 = vld [vmem:[%s386] sm:$0xff]
        %v388 = vld [vmem:[%s386 + $0x8] sm:$0xff]
        %v389 = vld [vmem:[%s386 + $0x10] sm:$0xff]
        %v390 = vld [vmem:[%s1] sm:$0x7]
        %v392 = vperm.slane %v390, 0
        %v393 = vperm.slane %v390, 1
        %v394 = vperm.slane %v390, 2
        %v398 = vmul.f32 %v383, %v392
        %v399 = vmul.f32 %v384, %v393
        %v400 = vmul.f32 %v385, %v394
        %v401 = vmul.f32 %v387, %v392
        %v402 = vmul.f32 %v388, %v393
        %v403 = vmul.f32 %v389, %v394
        %v404 = vld [vmem:[%s2] sm:$0x7]
        %v406 = vperm.slane %v404, 0
        %v407 = vperm.slane %v404, 1
        %v408 = vperm.slane %v404, 2
        %v412 = vmul.f32 %v383, %v406
        %v413 = vmul.f32 %v384, %v407
        %v414 = vmul.f32 %v385, %v408
        %v415 = vmul.f32 %v387, %v406
        %v416 = vmul.f32 %v388, %v407
        %v417 = vmul.f32 %v389, %v408
        %421 = vrot.lane.b32.xlu0 %v383, 127
        %v422 = vpop.permute.xlu0 %421
        %423 = vrot.lane.b32.xlu0 %v384, 127
        %v424 = vpop.permute.xlu0 %423
        %425 = vrot.lane.b32.xlu0 %v385, 127
        %v426 = vpop.permute.xlu0 %425
        %vm427 = vcmask 1039360
        %v428 = vsel %vm427, %v422, %v424
        %v429 = vsel %vm427, %v424, %v426
        %433 = vrot.lane.b32.xlu0 %v387, 127
        %v434 = vpop.permute.xlu0 %433
        %435 = vrot.lane.b32.xlu0 %v388, 127
        %v436 = vpop.permute.xlu0 %435
        %437 = vrot.lane.b32.xlu0 %v389, 127
        %v438 = vpop.permute.xlu0 %437
        %v439 = vsel %vm427, %v434, %v436
        %v440 = vsel %vm427, %v436, %v438
        %444 = vrot.lane.b32.xlu0 %v412, 126
        %v445 = vpop.permute.xlu0 %444
        %446 = vrot.lane.b32.xlu0 %v413, 126
        %v447 = vpop.permute.xlu0 %446
        %448 = vrot.lane.b32.xlu0 %v414, 126
        %v449 = vpop.permute.xlu0 %448
        %vm450 = vcmask 1031168
        %v451 = vsel %vm450, %v445, %v447
        %v452 = vsel %vm450, %v447, %v449
        %456 = vrot.lane.b32.xlu0 %v415, 126
        %v457 = vpop.permute.xlu0 %456
        %458 = vrot.lane.b32.xlu0 %v416, 126
        %v459 = vpop.permute.xlu0 %458
        %460 = vrot.lane.b32.xlu0 %v417, 126
        %v461 = vpop.permute.xlu0 %460
        %v462 = vsel %vm450, %v457, %v459
        %v463 = vsel %vm450, %v459, %v461
        %467 = vrot.lane.b32.xlu0 %v398, 112
        %v468 = vpop.permute.xlu0 %467
        %469 = vrot.lane.b32.xlu0 %v399, 112
        %v470 = vpop.permute.xlu0 %469
        %471 = vrot.lane.b32.xlu0 %v400, 112
        %v472 = vpop.permute.xlu0 %471
        %vm473 = vcmask 916480
        %v474 = vsel %vm473, %v468, %v470
        %v475 = vsel %vm473, %v470, %v472
        %479 = vrot.lane.b32.xlu0 %v401, 112
        %v480 = vpop.permute.xlu0 %479
        %481 = vrot.lane.b32.xlu0 %v402, 112
        %v482 = vpop.permute.xlu0 %481
        %483 = vrot.lane.b32.xlu0 %v403, 112
        %v484 = vpop.permute.xlu0 %483
        %v485 = vsel %vm473, %v480, %v482
        %v486 = vsel %vm473, %v482, %v484
        %487 = vrot.lane.b32.xlu0 %v383, 111
        %v488 = vpop.permute.xlu0 %487
        %489 = vrot.lane.b32.xlu0 %v384, 111
        %v490 = vpop.permute.xlu0 %489
        %491 = vrot.lane.b32.xlu0 %v385, 111
        %v492 = vpop.permute.xlu0 %491
        %vm493 = vcmask 908288
        %v494 = vsel %vm493, %v488, %v490
        %v495 = vsel %vm493, %v490, %v492
        %498 = vrot.lane.b32.xlu0 %v387, 111
        %v499 = vpop.permute.xlu0 %498
        %500 = vrot.lane.b32.xlu0 %v388, 111
        %v501 = vpop.permute.xlu0 %500
        %502 = vrot.lane.b32.xlu0 %v389, 111
        %v503 = vpop.permute.xlu0 %502
        %v504 = vsel %vm493, %v499, %v501
        %v505 = vsel %vm493, %v501, %v503
        %508 = vrot.lane.b32.xlu0 %v412, 110
        %v509 = vpop.permute.xlu0 %508
        %510 = vrot.lane.b32.xlu0 %v413, 110
        %v511 = vpop.permute.xlu0 %510
        %512 = vrot.lane.b32.xlu0 %v414, 110
        %v513 = vpop.permute.xlu0 %512
        %vm514 = vcmask 900096
        %v515 = vsel %vm514, %v509, %v511
        %v516 = vsel %vm514, %v511, %v513
        %517 = vrot.lane.b32.xlu0 %v415, 110
        %v518 = vpop.permute.xlu0 %517
        %519 = vrot.lane.b32.xlu0 %v416, 110
        %v520 = vpop.permute.xlu0 %519
        %521 = vrot.lane.b32.xlu0 %v417, 110
        %v522 = vpop.permute.xlu0 %521
        %v523 = vsel %vm514, %v518, %v520
        %v524 = vsel %vm514, %v520, %v522
        %525 = vrot.lane.b32.xlu0 %v398, 96
        %v526 = vpop.permute.xlu0 %525
        %527 = vrot.lane.b32.xlu0 %v399, 96
        %v528 = vpop.permute.xlu0 %527
        %529 = vrot.lane.b32.xlu0 %v400, 96
        %v530 = vpop.permute.xlu0 %529
        %vm531 = vcmask 785408
        %v532 = vsel %vm531, %v526, %v528
        %v533 = vsel %vm531, %v528, %v530
        %534 = vrot.lane.b32.xlu0 %v401, 96
        %v535 = vpop.permute.xlu0 %534
        %536 = vrot.lane.b32.xlu0 %v402, 96
        %v537 = vpop.permute.xlu0 %536
        %538 = vrot.lane.b32.xlu0 %v403, 96
        %v539 = vpop.permute.xlu0 %538
        %v540 = vsel %vm531, %v535, %v537
        %v541 = vsel %vm531, %v537, %v539
        %542 = vrot.lane.b32.xlu0 %v383, 95
        %v543 = vpop.permute.xlu0 %542
        %544 = vrot.lane.b32.xlu0 %v384, 95
        %v545 = vpop.permute.xlu0 %544
        %546 = vrot.lane.b32.xlu0 %v385, 95
        %v547 = vpop.permute.xlu0 %546
        %vm548 = vcmask 777216
        %v549 = vsel %vm548, %v543, %v545
        %v550 = vsel %vm548, %v545, %v547
        %551 = vrot.lane.b32.xlu0 %v387, 95
        %v552 = vpop.permute.xlu0 %551
        %553 = vrot.lane.b32.xlu0 %v388, 95
        %v554 = vpop.permute.xlu0 %553
        %555 = vrot.lane.b32.xlu0 %v389, 95
        %v556 = vpop.permute.xlu0 %555
        %v557 = vsel %vm548, %v552, %v554
        %v558 = vsel %vm548, %v554, %v556
        %559 = vrot.lane.b32.xlu0 %v412, 94
        %v560 = vpop.permute.xlu0 %559
        %561 = vrot.lane.b32.xlu0 %v413, 94
        %v562 = vpop.permute.xlu0 %561
        %563 = vrot.lane.b32.xlu0 %v414, 94
        %v564 = vpop.permute.xlu0 %563
        %vm565 = vcmask 769024
        %v566 = vsel %vm565, %v560, %v562
        %v567 = vsel %vm565, %v562, %v564
        %570 = vrot.lane.b32.xlu0 %v415, 94
        %v571 = vpop.permute.xlu0 %570
        %572 = vrot.lane.b32.xlu0 %v416, 94
        %v573 = vpop.permute.xlu0 %572
        %574 = vrot.lane.b32.xlu0 %v417, 94
        %v575 = vpop.permute.xlu0 %574
        %v576 = vsel %vm565, %v571, %v573
        %v577 = vsel %vm565, %v573, %v575
        %580 = vst [vmem:[#allocation2] sm:$0x3] %v398
        %581 = vst [vmem:[#allocation2 + $0x8] sm:$0x3] %v399
        %582 = vst [vmem:[#allocation2 + $0x10] sm:$0x3] %v401
        %583 = vst [vmem:[#allocation2 + $0x18] sm:$0x3] %v402
        %584 = vst [vmem:[#allocation2 + $0x40] sm:$0xc] %v398
        %585 = vst [vmem:[#allocation2 + $0x48] sm:$0xc] %v399
        %586 = vst [vmem:[#allocation2 + $0x50] sm:$0xc] %v401
        %587 = vst [vmem:[#allocation2 + $0x58] sm:$0xc] %v402
        %588 = vst [vmem:[#allocation2 + $0x80] sm:$0x30] %v398
        %589 = vst [vmem:[#allocation2 + $0x88] sm:$0x30] %v399
        %590 = vst [vmem:[#allocation2 + $0x90] sm:$0x30] %v401
        %591 = vst [vmem:[#allocation2 + $0x98] sm:$0x30] %v402
        %592 = vst [vmem:[#allocation2 + $0xc0] sm:$0xc0] %v398
        %593 = vst [vmem:[#allocation2 + $0xc8] sm:$0xc0] %v399
        %594 = vst [vmem:[#allocation2 + $0xd0] sm:$0xc0] %v401
        %595 = vst [vmem:[#allocation2 + $0xd8] sm:$0xc0] %v402
        %v596 = vrot.slane %v428, 6
        %v597 = vrot.slane %v429, 6
        %v598 = vrot.slane %v439, 6
        %v599 = vrot.slane %v440, 6
        %604 = vst [vmem:[#allocation2] sm:$0xc] %v596
        %605 = vst [vmem:[#allocation2 + $0x8] sm:$0xc] %v597
        %606 = vst [vmem:[#allocation2 + $0x10] sm:$0xc] %v598
        %607 = vst [vmem:[#allocation2 + $0x18] sm:$0xc] %v599
        %608 = vst [vmem:[#allocation2 + $0x40] sm:$0x30] %v596
        %609 = vst [vmem:[#allocation2 + $0x48] sm:$0x30] %v597
        %610 = vst [vmem:[#allocation2 + $0x50] sm:$0x30] %v598
        %611 = vst [vmem:[#allocation2 + $0x58] sm:$0x30] %v599
        %612 = vst [vmem:[#allocation2 + $0x80] sm:$0xc0] %v596
        %613 = vst [vmem:[#allocation2 + $0x88] sm:$0xc0] %v597
        %614 = vst [vmem:[#allocation2 + $0x90] sm:$0xc0] %v598
        %615 = vst [vmem:[#allocation2 + $0x98] sm:$0xc0] %v599
        %616 = vst [vmem:[#allocation2 + $0xe0] sm:$0x3] %v596
        %617 = vst [vmem:[#allocation2 + $0xe8] sm:$0x3] %v597
        %618 = vst [vmem:[#allocation2 + $0xf0] sm:$0x3] %v598
        %619 = vst [vmem:[#allocation2 + $0xf8] sm:$0x3] %v599
        %v620 = vrot.slane %v451, 4
        %v621 = vrot.slane %v452, 4
        %v622 = vrot.slane %v462, 4
        %v623 = vrot.slane %v463, 4
        %628 = vst [vmem:[#allocation2] sm:$0x30] %v620
        %629 = vst [vmem:[#allocation2 + $0x8] sm:$0x30] %v621
        %630 = vst [vmem:[#allocation2 + $0x10] sm:$0x30] %v622
        %631 = vst [vmem:[#allocation2 + $0x18] sm:$0x30] %v623
        %632 = vst [vmem:[#allocation2 + $0x40] sm:$0xc0] %v620
        %633 = vst [vmem:[#allocation2 + $0x48] sm:$0xc0] %v621
        %634 = vst [vmem:[#allocation2 + $0x50] sm:$0xc0] %v622
        %635 = vst [vmem:[#allocation2 + $0x58] sm:$0xc0] %v623
        %636 = vst [vmem:[#allocation2 + $0xa0] sm:$0x3] %v620
        %637 = vst [vmem:[#allocation2 + $0xa8] sm:$0x3] %v621
        %638 = vst [vmem:[#allocation2 + $0xb0] sm:$0x3] %v622
        %639 = vst [vmem:[#allocation2 + $0xb8] sm:$0x3] %v623
        %640 = vst [vmem:[#allocation2 + $0xe0] sm:$0xc] %v620
        %641 = vst [vmem:[#allocation2 + $0xe8] sm:$0xc] %v621
        %642 = vst [vmem:[#allocation2 + $0xf0] sm:$0xc] %v622
        %643 = vst [vmem:[#allocation2 + $0xf8] sm:$0xc] %v623
        %v644 = vrot.slane %v474, 2
        %v645 = vrot.slane %v475, 2
        %v646 = vrot.slane %v485, 2
        %v647 = vrot.slane %v486, 2
        %652 = vst [vmem:[#allocation2] sm:$0xc0] %v644
        %653 = vst [vmem:[#allocation2 + $0x8] sm:$0xc0] %v645
        %654 = vst [vmem:[#allocation2 + $0x10] sm:$0xc0] %v646
        %655 = vst [vmem:[#allocation2 + $0x18] sm:$0xc0] %v647
        %656 = vst [vmem:[#allocation2 + $0x60] sm:$0x3] %v644
        %657 = vst [vmem:[#allocation2 + $0x68] sm:$0x3] %v645
        %658 = vst [vmem:[#allocation2 + $0x70] sm:$0x3] %v646
        %659 = vst [vmem:[#allocation2 + $0x78] sm:$0x3] %v647
        %660 = vst [vmem:[#allocation2 + $0xa0] sm:$0xc] %v644
        %661 = vst [vmem:[#allocation2 + $0xa8] sm:$0xc] %v645
        %662 = vst [vmem:[#allocation2 + $0xb0] sm:$0xc] %v646
        %663 = vst [vmem:[#allocation2 + $0xb8] sm:$0xc] %v647
        %664 = vst [vmem:[#allocation2 + $0xe0] sm:$0x30] %v644
        %665 = vst [vmem:[#allocation2 + $0xe8] sm:$0x30] %v645
        %666 = vst [vmem:[#allocation2 + $0xf0] sm:$0x30] %v646
        %667 = vst [vmem:[#allocation2 + $0xf8] sm:$0x30] %v647
        %668 = vst [vmem:[#allocation2 + $0x20] sm:$0x3] %v494
        %669 = vst [vmem:[#allocation2 + $0x28] sm:$0x3] %v495
        %670 = vst [vmem:[#allocation2 + $0x30] sm:$0x3] %v504
        %671 = vst [vmem:[#allocation2 + $0x38] sm:$0x3] %v505
        %672 = vst [vmem:[#allocation2 + $0x60] sm:$0xc] %v494
        %673 = vst [vmem:[#allocation2 + $0x68] sm:$0xc] %v495
        %674 = vst [vmem:[#allocation2 + $0x70] sm:$0xc] %v504
        %675 = vst [vmem:[#allocation2 + $0x78] sm:$0xc] %v505
        %676 = vst [vmem:[#allocation2 + $0xa0] sm:$0x30] %v494
        %677 = vst [vmem:[#allocation2 + $0xa8] sm:$0x30] %v495
        %678 = vst [vmem:[#allocation2 + $0xb0] sm:$0x30] %v504
        %679 = vst [vmem:[#allocation2 + $0xb8] sm:$0x30] %v505
        %680 = vst [vmem:[#allocation2 + $0xe0] sm:$0xc0] %v494
        %681 = vst [vmem:[#allocation2 + $0xe8] sm:$0xc0] %v495
        %682 = vst [vmem:[#allocation2 + $0xf0] sm:$0xc0] %v504
        %683 = vst [vmem:[#allocation2 + $0xf8] sm:$0xc0] %v505
        %v684 = vrot.slane %v515, 6
        %v685 = vrot.slane %v516, 6
        %v686 = vrot.slane %v523, 6
        %v687 = vrot.slane %v524, 6
        %692 = vst [vmem:[#allocation2 + $0x20] sm:$0xc] %v684
        %693 = vst [vmem:[#allocation2 + $0x28] sm:$0xc] %v685
        %694 = vst [vmem:[#allocation2 + $0x30] sm:$0xc] %v686
        %695 = vst [vmem:[#allocation2 + $0x38] sm:$0xc] %v687
        %696 = vst [vmem:[#allocation2 + $0x60] sm:$0x30] %v684
        %697 = vst [vmem:[#allocation2 + $0x68] sm:$0x30] %v685
        %698 = vst [vmem:[#allocation2 + $0x70] sm:$0x30] %v686
        %699 = vst [vmem:[#allocation2 + $0x78] sm:$0x30] %v687
        %700 = vst [vmem:[#allocation2 + $0xa0] sm:$0xc0] %v684
        %701 = vst [vmem:[#allocation2 + $0xa8] sm:$0xc0] %v685
        %702 = vst [vmem:[#allocation2 + $0xb0] sm:$0xc0] %v686
        %703 = vst [vmem:[#allocation2 + $0xb8] sm:$0xc0] %v687
        %704 = vst [vmem:[#allocation2 + $0x100] sm:$0x3] %v684
        %705 = vst [vmem:[#allocation2 + $0x108] sm:$0x3] %v685
        %706 = vst [vmem:[#allocation2 + $0x110] sm:$0x3] %v686
        %707 = vst [vmem:[#allocation2 + $0x118] sm:$0x3] %v687
        %v708 = vrot.slane %v532, 4
        %v709 = vrot.slane %v533, 4
        %v710 = vrot.slane %v540, 4
        %v711 = vrot.slane %v541, 4
        %716 = vst [vmem:[#allocation2 + $0x20] sm:$0x30] %v708
        %717 = vst [vmem:[#allocation2 + $0x28] sm:$0x30] %v709
        %718 = vst [vmem:[#allocation2 + $0x30] sm:$0x30] %v710
        %719 = vst [vmem:[#allocation2 + $0x38] sm:$0x30] %v711
        %720 = vst [vmem:[#allocation2 + $0x60] sm:$0xc0] %v708
        %721 = vst [vmem:[#allocation2 + $0x68] sm:$0xc0] %v709
        %722 = vst [vmem:[#allocation2 + $0x70] sm:$0xc0] %v710
        %723 = vst [vmem:[#allocation2 + $0x78] sm:$0xc0] %v711
        %724 = vst [vmem:[#allocation2 + $0xc0] sm:$0x3] %v708
        %725 = vst [vmem:[#allocation2 + $0xc8] sm:$0x3] %v709
        %726 = vst [vmem:[#allocation2 + $0xd0] sm:$0x3] %v710
        %727 = vst [vmem:[#allocation2 + $0xd8] sm:$0x3] %v711
        %728 = vst [vmem:[#allocation2 + $0x100] sm:$0xc] %v708
        %729 = vst [vmem:[#allocation2 + $0x108] sm:$0xc] %v709
        %730 = vst [vmem:[#allocation2 + $0x110] sm:$0xc] %v710
        %731 = vst [vmem:[#allocation2 + $0x118] sm:$0xc] %v711
        %v732 = vrot.slane %v549, 2
        %v733 = vrot.slane %v550, 2
        %v734 = vrot.slane %v557, 2
        %v735 = vrot.slane %v558, 2
        %740 = vst [vmem:[#allocation2 + $0x20] sm:$0xc0] %v732
        %741 = vst [vmem:[#allocation2 + $0x28] sm:$0xc0] %v733
        %742 = vst [vmem:[#allocation2 + $0x30] sm:$0xc0] %v734
        %743 = vst [vmem:[#allocation2 + $0x38] sm:$0xc0] %v735
        %744 = vst [vmem:[#allocation2 + $0x80] sm:$0x3] %v732
        %745 = vst [vmem:[#allocation2 + $0x88] sm:$0x3] %v733
        %746 = vst [vmem:[#allocation2 + $0x90] sm:$0x3] %v734
        %747 = vst [vmem:[#allocation2 + $0x98] sm:$0x3] %v735
        %748 = vst [vmem:[#allocation2 + $0xc0] sm:$0xc] %v732
        %749 = vst [vmem:[#allocation2 + $0xc8] sm:$0xc] %v733
        %750 = vst [vmem:[#allocation2 + $0xd0] sm:$0xc] %v734
        %751 = vst [vmem:[#allocation2 + $0xd8] sm:$0xc] %v735
        %752 = vst [vmem:[#allocation2 + $0x100] sm:$0x30] %v732
        %753 = vst [vmem:[#allocation2 + $0x108] sm:$0x30] %v733
        %754 = vst [vmem:[#allocation2 + $0x110] sm:$0x30] %v734
        %755 = vst [vmem:[#allocation2 + $0x118] sm:$0x30] %v735
        %756 = vst [vmem:[#allocation2 + $0x40] sm:$0x3] %v566
        %757 = vst [vmem:[#allocation2 + $0x48] sm:$0x3] %v567
        %758 = vst [vmem:[#allocation2 + $0x50] sm:$0x3] %v576
        %759 = vst [vmem:[#allocation2 + $0x58] sm:$0x3] %v577
        %760 = vst [vmem:[#allocation2 + $0x80] sm:$0xc] %v566
        %761 = vst [vmem:[#allocation2 + $0x88] sm:$0xc] %v567
        %762 = vst [vmem:[#allocation2 + $0x90] sm:$0xc] %v576
        %763 = vst [vmem:[#allocation2 + $0x98] sm:$0xc] %v577
        %764 = vst [vmem:[#allocation2 + $0xc0] sm:$0x30] %v566
        %765 = vst [vmem:[#allocation2 + $0xc8] sm:$0x30] %v567
        %766 = vst [vmem:[#allocation2 + $0xd0] sm:$0x30] %v576
        %767 = vst [vmem:[#allocation2 + $0xd8] sm:$0x30] %v577
        %768 = vst [vmem:[#allocation2 + $0x100] sm:$0xc0] %v566
        %769 = vst [vmem:[#allocation2 + $0x108] sm:$0xc0] %v567
        %770 = vst [vmem:[#allocation2 + $0x110] sm:$0xc0] %v576
        %771 = vst [vmem:[#allocation2 + $0x118] sm:$0xc0] %v577
        %v772 = vld [vmem:[%s4] sm:$0xff]
        %v773 = vld [vmem:[%s3] sm:$0x3]
        %v774 = vld [vmem:[#allocation2] sm:$0xff]
        %v775 = vld [vmem:[#allocation2 + $0x8] sm:$0xff]
        %v776 = vld [vmem:[#allocation2 + $0x10] sm:$0xff]
        %v777 = vld [vmem:[#allocation2 + $0x18] sm:$0xff]
        %v778 = vld [vmem:[#allocation2 + $0x20] sm:$0xff]
        %v779 = vld [vmem:[#allocation2 + $0x28] sm:$0xff]
        %v780 = vld [vmem:[#allocation2 + $0x30] sm:$0xff]
        %v781 = vld [vmem:[#allocation2 + $0x38] sm:$0xff]
        %v782 = vld [vmem:[#allocation2 + $0x40] sm:$0x3]
        %v783 = vld [vmem:[#allocation2 + $0x48] sm:$0x3]
        %v784 = vld [vmem:[#allocation2 + $0x50] sm:$0x3]
        %v785 = vld [vmem:[#allocation2 + $0x58] sm:$0x3]
        %787 = vset.pattern.permute.xlu0 0
        %788 = vperm.xlu0 %787, %v772
        %v789 = vpop.permute.xlu0 %788
        %vm791 = vcmask 146432
        %v793 = vsel %vm791, %v773, 0
        %vm795 = vcmask 1041408
        %v797 = vsel %vm795, %v782, 0
        %v800 = vsel %vm795, %v783, 0
        %v803 = vsel %vm795, %v784, 0
        %v806 = vsel %vm795, %v785, 0
        %808 = vmatpush.msra.mxu0 0.0
        %809 = vmatpush.msra.mxu0 0.0
        %810 = vmatpush.msra.mxu0 0.0
        %811 = vmatpush.msra.mxu0 0.0
        %812 = vmatpush.msra.mxu0 0.0
        %813 = vmatpush.msra.mxu0 0.0
        %814 = vmatpush.msra.mxu0 0.0
        %815 = vmatpush.msra.mxu0 0.0
        %816 = vmatpush.msra.mxu0 0.0
        %817 = vmatpush.msra.mxu0 0.0
        %818 = vmatpush.msra.mxu0 0.0
        %819 = vmatpush.msra.mxu0 0.0
        %820 = vmatpush.msra.mxu0 0.0
        %821 = vmatpush.msra.mxu0 %v797
        %822 = vmatpush.msra.mxu0 %v778
        %823 = vmatpush.msra.mxu0 %v774
        %824 = vmatmul.f32.gmra.mxu0 %v793
        %v825 = vpop.f32.mrf.mxu0
        %v826 = vadd.f32 %v789, %v825
        %827 = vdwg.mxu0
        %828 = vmatpush.msra.mxu0 0.0
        %829 = vmatpush.msra.mxu0 0.0
        %830 = vmatpush.msra.mxu0 0.0
        %831 = vmatpush.msra.mxu0 0.0
        %832 = vmatpush.msra.mxu0 0.0
        %833 = vmatpush.msra.mxu0 0.0
        %834 = vmatpush.msra.mxu0 0.0
        %835 = vmatpush.msra.mxu0 0.0
        %836 = vmatpush.msra.mxu0 0.0
        %837 = vmatpush.msra.mxu0 0.0
        %838 = vmatpush.msra.mxu0 0.0
        %839 = vmatpush.msra.mxu0 0.0
        %840 = vmatpush.msra.mxu0 0.0
        %841 = vmatpush.msra.mxu0 %v800
        %842 = vmatpush.msra.mxu0 %v779
        %843 = vmatpush.msra.mxu0 %v775
        %844 = vmatmul.f32.gmra.mxu0 %v793
        %v845 = vpop.f32.mrf.mxu0
        %v846 = vadd.f32 %v789, %v845
        %847 = vdwg.mxu0
        %848 = vmatpush.msra.mxu0 0.0
        %849 = vmatpush.msra.mxu0 0.0
        %850 = vmatpush.msra.mxu0 0.0
        %851 = vmatpush.msra.mxu0 0.0
        %852 = vmatpush.msra.mxu0 0.0
        %853 = vmatpush.msra.mxu0 0.0
        %854 = vmatpush.msra.mxu0 0.0
        %855 = vmatpush.msra.mxu0 0.0
        %856 = vmatpush.msra.mxu0 0.0
        %857 = vmatpush.msra.mxu0 0.0
        %858 = vmatpush.msra.mxu0 0.0
        %859 = vmatpush.msra.mxu0 0.0
        %860 = vmatpush.msra.mxu0 0.0
        %861 = vmatpush.msra.mxu0 %v803
        %862 = vmatpush.msra.mxu0 %v780
        %863 = vmatpush.msra.mxu0 %v776
        %864 = vmatmul.f32.gmra.mxu0 %v793
        %v865 = vpop.f32.mrf.mxu0
        %v866 = vadd.f32 %v789, %v865
        %867 = vdwg.mxu0
        %868 = vmatpush.msra.mxu0 0.0
        %869 = vmatpush.msra.mxu0 0.0
        %870 = vmatpush.msra.mxu0 0.0
        %871 = vmatpush.msra.mxu0 0.0
        %872 = vmatpush.msra.mxu0 0.0
        %873 = vmatpush.msra.mxu0 0.0
        %874 = vmatpush.msra.mxu0 0.0
        %875 = vmatpush.msra.mxu0 0.0
        %876 = vmatpush.msra.mxu0 0.0
        %877 = vmatpush.msra.mxu0 0.0
        %878 = vmatpush.msra.mxu0 0.0
        %879 = vmatpush.msra.mxu0 0.0
        %880 = vmatpush.msra.mxu0 0.0
        %881 = vmatpush.msra.mxu0 %v806
        %882 = vmatpush.msra.mxu0 %v781
        %883 = vmatpush.msra.mxu0 %v777
        %884 = vmatmul.f32.gmra.mxu0 %v793
        %v885 = vpop.f32.mrf.mxu0
        %v886 = vadd.f32 %v789, %v885
        %887 = vdwg.mxu0
        %v888 = vmax.f32 %v826, 0.0
        %v889 = vmax.f32 %v846, 0.0
        %v890 = vmax.f32 %v866, 0.0
        %v891 = vmax.f32 %v886, 0.0
        %892 = vst [vmem:[#allocation3] sm:$0x3] %v888
        %893 = vst [vmem:[#allocation3 + $0x8] sm:$0x3] %v889
        %894 = vst [vmem:[#allocation3 + $0x10] sm:$0x3] %v890
        %895 = vst [vmem:[#allocation3 + $0x18] sm:$0x3] %v891
        %s896 = scalar_lea.vmem %s3, 2
        %v897 = vld [vmem:[%s896] sm:$0x3]
        %v898 = vld [vmem:[#allocation2 + $0x40] sm:$0xfc]
        %v899 = vld [vmem:[#allocation2 + $0x48] sm:$0xfc]
        %v900 = vld [vmem:[#allocation2 + $0x50] sm:$0xfc]
        %v901 = vld [vmem:[#allocation2 + $0x58] sm:$0xfc]
        %v902 = vld [vmem:[#allocation2 + $0x60] sm:$0xff]
        %v903 = vld [vmem:[#allocation2 + $0x68] sm:$0xff]
        %v904 = vld [vmem:[#allocation2 + $0x70] sm:$0xff]
        %v905 = vld [vmem:[#allocation2 + $0x78] sm:$0xff]
        %v906 = vld [vmem:[#allocation2 + $0x80] sm:$0xf]
        %v907 = vld [vmem:[#allocation2 + $0x88] sm:$0xf]
        %v908 = vld [vmem:[#allocation2 + $0x90] sm:$0xf]
        %v909 = vld [vmem:[#allocation2 + $0x98] sm:$0xf]
        %vm922 = vcmask 1045504
        %v923 = vrot.slane %v898, 2
        %v924 = vrot.slane %v902, 2
        %v925 = vsel %vm922, %v923, %v924
        %v926 = vrot.slane %v899, 2
        %v927 = vrot.slane %v903, 2
        %v928 = vsel %vm922, %v926, %v927
        %v929 = vrot.slane %v900, 2
        %v930 = vrot.slane %v904, 2
        %v931 = vsel %vm922, %v929, %v930
        %v932 = vrot.slane %v901, 2
        %v933 = vrot.slane %v905, 2
        %v934 = vsel %vm922, %v932, %v933
        %v935 = vrot.slane %v906, 2
        %v936 = vsel %vm922, %v924, %v935
        %v937 = vrot.slane %v907, 2
        %v938 = vsel %vm922, %v927, %v937
        %v939 = vrot.slane %v908, 2
        %v940 = vsel %vm922, %v930, %v939
        %v941 = vrot.slane %v909, 2
        %v942 = vsel %vm922, %v933, %v941
        %v951 = vrot.slane %v789, 2
        %v954 = vsel %vm791, %v897, 0
        %v956 = vsel %vm795, %v935, 0
        %v958 = vsel %vm795, %v937, 0
        %v960 = vsel %vm795, %v939, 0
        %v962 = vsel %vm795, %v941, 0
        %964 = vmatpush.msra.mxu0 0.0
        %965 = vmatpush.msra.mxu0 0.0
        %966 = vmatpush.msra.mxu0 0.0
        %967 = vmatpush.msra.mxu0 0.0
        %968 = vmatpush.msra.mxu0 0.0
        %969 = vmatpush.msra.mxu0 0.0
        %970 = vmatpush.msra.mxu0 0.0
        %971 = vmatpush.msra.mxu0 0.0
        %972 = vmatpush.msra.mxu0 0.0
        %973 = vmatpush.msra.mxu0 0.0
        %974 = vmatpush.msra.mxu0 0.0
        %975 = vmatpush.msra.mxu0 0.0
        %976 = vmatpush.msra.mxu0 0.0
        %977 = vmatpush.msra.mxu0 %v956
        %978 = vmatpush.msra.mxu0 %v936
        %979 = vmatpush.msra.mxu0 %v925
        %980 = vmatmul.f32.gmra.mxu0 %v954
        %v981 = vpop.f32.mrf.mxu0
        %v982 = vadd.f32 %v951, %v981
        %983 = vdwg.mxu0
        %984 = vmatpush.msra.mxu0 0.0
        %985 = vmatpush.msra.mxu0 0.0
        %986 = vmatpush.msra.mxu0 0.0
        %987 = vmatpush.msra.mxu0 0.0
        %988 = vmatpush.msra.mxu0 0.0
        %989 = vmatpush.msra.mxu0 0.0
        %990 = vmatpush.msra.mxu0 0.0
        %991 = vmatpush.msra.mxu0 0.0
        %992 = vmatpush.msra.mxu0 0.0
        %993 = vmatpush.msra.mxu0 0.0
        %994 = vmatpush.msra.mxu0 0.0
        %995 = vmatpush.msra.mxu0 0.0
        %996 = vmatpush.msra.mxu0 0.0
        %997 = vmatpush.msra.mxu0 %v958
        %998 = vmatpush.msra.mxu0 %v938
        %999 = vmatpush.msra.mxu0 %v928
        %1000 = vmatmul.f32.gmra.mxu0 %v954
        %v1001 = vpop.f32.mrf.mxu0
        %v1002 = vadd.f32 %v951, %v1001
        %1003 = vdwg.mxu0
        %1004 = vmatpush.msra.mxu0 0.0
        %1005 = vmatpush.msra.mxu0 0.0
        %1006 = vmatpush.msra.mxu0 0.0
        %1007 = vmatpush.msra.mxu0 0.0
        %1008 = vmatpush.msra.mxu0 0.0
        %1009 = vmatpush.msra.mxu0 0.0
        %1010 = vmatpush.msra.mxu0 0.0
        %1011 = vmatpush.msra.mxu0 0.0
        %1012 = vmatpush.msra.mxu0 0.0
        %1013 = vmatpush.msra.mxu0 0.0
        %1014 = vmatpush.msra.mxu0 0.0
        %1015 = vmatpush.msra.mxu0 0.0
        %1016 = vmatpush.msra.mxu0 0.0
        %1017 = vmatpush.msra.mxu0 %v960
        %1018 = vmatpush.msra.mxu0 %v940
        %1019 = vmatpush.msra.mxu0 %v931
        %1020 = vmatmul.f32.gmra.mxu0 %v954
        %v1021 = vpop.f32.mrf.mxu0
        %v1022 = vadd.f32 %v951, %v1021
        %1023 = vdwg.mxu0
        %1024 = vmatpush.msra.mxu0 0.0
        %1025 = vmatpush.msra.mxu0 0.0
        %1026 = vmatpush.msra.mxu0 0.0
        %1027 = vmatpush.msra.mxu0 0.0
        %1028 = vmatpush.msra.mxu0 0.0
        %1029 = vmatpush.msra.mxu0 0.0
        %1030 = vmatpush.msra.mxu0 0.0
        %1031 = vmatpush.msra.mxu0 0.0
        %1032 = vmatpush.msra.mxu0 0.0
        %1033 = vmatpush.msra.mxu0 0.0
        %1034 = vmatpush.msra.mxu0 0.0
        %1035 = vmatpush.msra.mxu0 0.0
        %1036 = vmatpush.msra.mxu0 0.0
        %1037 = vmatpush.msra.mxu0 %v962
        %1038 = vmatpush.msra.mxu0 %v942
        %1039 = vmatpush.msra.mxu0 %v934
        %1040 = vmatmul.f32.gmra.mxu0 %v954
        %v1041 = vpop.f32.mrf.mxu0
        %v1042 = vadd.f32 %v951, %v1041
        %1043 = vdwg.mxu0
        %v1044 = vmax.f32 %v982, 0.0
        %v1045 = vmax.f32 %v1002, 0.0
        %v1046 = vmax.f32 %v1022, 0.0
        %v1047 = vmax.f32 %v1042, 0.0
        %v1052 = vrot.slane %v1044, 6
        %v1053 = vrot.slane %v1045, 6
        %v1054 = vrot.slane %v1046, 6
        %v1055 = vrot.slane %v1047, 6
        %1060 = vst [vmem:[#allocation3] sm:$0xc] %v1052
        %1061 = vst [vmem:[#allocation3 + $0x8] sm:$0xc] %v1053
        %1062 = vst [vmem:[#allocation3 + $0x10] sm:$0xc] %v1054
        %1063 = vst [vmem:[#allocation3 + $0x18] sm:$0xc] %v1055
        %s1064 = scalar_lea.vmem %s3, 4
        %v1065 = vld [vmem:[%s1064] sm:$0x3]
        %v1066 = vld [vmem:[#allocation2 + $0x80] sm:$0xf0]
        %v1067 = vld [vmem:[#allocation2 + $0x88] sm:$0xf0]
        %v1068 = vld [vmem:[#allocation2 + $0x90] sm:$0xf0]
        %v1069 = vld [vmem:[#allocation2 + $0x98] sm:$0xf0]
        %v1070 = vld [vmem:[#allocation2 + $0xa0] sm:$0xff]
        %v1071 = vld [vmem:[#allocation2 + $0xa8] sm:$0xff]
        %v1072 = vld [vmem:[#allocation2 + $0xb0] sm:$0xff]
        %v1073 = vld [vmem:[#allocation2 + $0xb8] sm:$0xff]
        %v1074 = vld [vmem:[#allocation2 + $0xc0] sm:$0x3f]
        %v1075 = vld [vmem:[#allocation2 + $0xc8] sm:$0x3f]
        %v1076 = vld [vmem:[#allocation2 + $0xd0] sm:$0x3f]
        %v1077 = vld [vmem:[#allocation2 + $0xd8] sm:$0x3f]
        %vm1090 = vcmask 1043456
        %v1091 = vrot.slane %v1066, 4
        %v1092 = vrot.slane %v1070, 4
        %v1093 = vsel %vm1090, %v1091, %v1092
        %v1094 = vrot.slane %v1067, 4
        %v1095 = vrot.slane %v1071, 4
        %v1096 = vsel %vm1090, %v1094, %v1095
        %v1097 = vrot.slane %v1068, 4
        %v1098 = vrot.slane %v1072, 4
        %v1099 = vsel %vm1090, %v1097, %v1098
        %v1100 = vrot.slane %v1069, 4
        %v1101 = vrot.slane %v1073, 4
        %v1102 = vsel %vm1090, %v1100, %v1101
        %v1103 = vrot.slane %v1074, 4
        %v1104 = vsel %vm1090, %v1092, %v1103
        %v1105 = vrot.slane %v1075, 4
        %v1106 = vsel %vm1090, %v1095, %v1105
        %v1107 = vrot.slane %v1076, 4
        %v1108 = vsel %vm1090, %v1098, %v1107
        %v1109 = vrot.slane %v1077, 4
        %v1110 = vsel %vm1090, %v1101, %v1109
        %v1119 = vrot.slane %v789, 4
        %v1122 = vsel %vm791, %v1065, 0
        %v1124 = vsel %vm795, %v1103, 0
        %v1126 = vsel %vm795, %v1105, 0
        %v1128 = vsel %vm795, %v1107, 0
        %v1130 = vsel %vm795, %v1109, 0
        %1132 = vmatpush.msra.mxu0 0.0
        %1133 = vmatpush.msra.mxu0 0.0
        %1134 = vmatpush.msra.mxu0 0.0
        %1135 = vmatpush.msra.mxu0 0.0
        %1136 = vmatpush.msra.mxu0 0.0
        %1137 = vmatpush.msra.mxu0 0.0
        %1138 = vmatpush.msra.mxu0 0.0
        %1139 = vmatpush.msra.mxu0 0.0
        %1140 = vmatpush.msra.mxu0 0.0
        %1141 = vmatpush.msra.mxu0 0.0
        %1142 = vmatpush.msra.mxu0 0.0
        %1143 = vmatpush.msra.mxu0 0.0
        %1144 = vmatpush.msra.mxu0 0.0
        %1145 = vmatpush.msra.mxu0 %v1124
        %1146 = vmatpush.msra.mxu0 %v1104
        %1147 = vmatpush.msra.mxu0 %v1093
        %1148 = vmatmul.f32.gmra.mxu0 %v1122
        %v1149 = vpop.f32.mrf.mxu0
        %v1150 = vadd.f32 %v1119, %v1149
        %1151 = vdwg.mxu0
        %1152 = vmatpush.msra.mxu0 0.0
        %1153 = vmatpush.msra.mxu0 0.0
        %1154 = vmatpush.msra.mxu0 0.0
        %1155 = vmatpush.msra.mxu0 0.0
        %1156 = vmatpush.msra.mxu0 0.0
        %1157 = vmatpush.msra.mxu0 0.0
        %1158 = vmatpush.msra.mxu0 0.0
        %1159 = vmatpush.msra.mxu0 0.0
        %1160 = vmatpush.msra.mxu0 0.0
        %1161 = vmatpush.msra.mxu0 0.0
        %1162 = vmatpush.msra.mxu0 0.0
        %1163 = vmatpush.msra.mxu0 0.0
        %1164 = vmatpush.msra.mxu0 0.0
        %1165 = vmatpush.msra.mxu0 %v1126
        %1166 = vmatpush.msra.mxu0 %v1106
        %1167 = vmatpush.msra.mxu0 %v1096
        %1168 = vmatmul.f32.gmra.mxu0 %v1122
        %v1169 = vpop.f32.mrf.mxu0
        %v1170 = vadd.f32 %v1119, %v1169
        %1171 = vdwg.mxu0
        %1172 = vmatpush.msra.mxu0 0.0
        %1173 = vmatpush.msra.mxu0 0.0
        %1174 = vmatpush.msra.mxu0 0.0
        %1175 = vmatpush.msra.mxu0 0.0
        %1176 = vmatpush.msra.mxu0 0.0
        %1177 = vmatpush.msra.mxu0 0.0
        %1178 = vmatpush.msra.mxu0 0.0
        %1179 = vmatpush.msra.mxu0 0.0
        %1180 = vmatpush.msra.mxu0 0.0
        %1181 = vmatpush.msra.mxu0 0.0
        %1182 = vmatpush.msra.mxu0 0.0
        %1183 = vmatpush.msra.mxu0 0.0
        %1184 = vmatpush.msra.mxu0 0.0
        %1185 = vmatpush.msra.mxu0 %v1128
        %1186 = vmatpush.msra.mxu0 %v1108
        %1187 = vmatpush.msra.mxu0 %v1099
        %1188 = vmatmul.f32.gmra.mxu0 %v1122
        %v1189 = vpop.f32.mrf.mxu0
        %v1190 = vadd.f32 %v1119, %v1189
        %1191 = vdwg.mxu0
        %1192 = vmatpush.msra.mxu0 0.0
        %1193 = vmatpush.msra.mxu0 0.0
        %1194 = vmatpush.msra.mxu0 0.0
        %1195 = vmatpush.msra.mxu0 0.0
        %1196 = vmatpush.msra.mxu0 0.0
        %1197 = vmatpush.msra.mxu0 0.0
        %1198 = vmatpush.msra.mxu0 0.0
        %1199 = vmatpush.msra.mxu0 0.0
        %1200 = vmatpush.msra.mxu0 0.0
        %1201 = vmatpush.msra.mxu0 0.0
        %1202 = vmatpush.msra.mxu0 0.0
        %1203 = vmatpush.msra.mxu0 0.0
        %1204 = vmatpush.msra.mxu0 0.0
        %1205 = vmatpush.msra.mxu0 %v1130
        %1206 = vmatpush.msra.mxu0 %v1110
        %1207 = vmatpush.msra.mxu0 %v1102
        %1208 = vmatmul.f32.gmra.mxu0 %v1122
        %v1209 = vpop.f32.mrf.mxu0
        %v1210 = vadd.f32 %v1119, %v1209
        %1211 = vdwg.mxu0
        %v1212 = vmax.f32 %v1150, 0.0
        %v1213 = vmax.f32 %v1170, 0.0
        %v1214 = vmax.f32 %v1190, 0.0
        %v1215 = vmax.f32 %v1210, 0.0
        %v1220 = vrot.slane %v1212, 4
        %v1221 = vrot.slane %v1213, 4
        %v1222 = vrot.slane %v1214, 4
        %v1223 = vrot.slane %v1215, 4
        %1228 = vst [vmem:[#allocation3] sm:$0x30] %v1220
        %1229 = vst [vmem:[#allocation3 + $0x8] sm:$0x30] %v1221
        %1230 = vst [vmem:[#allocation3 + $0x10] sm:$0x30] %v1222
        %1231 = vst [vmem:[#allocation3 + $0x18] sm:$0x30] %v1223
        %s1232 = scalar_lea.vmem %s3, 6
        %v1233 = vld [vmem:[%s1232] sm:$0x3]
        %v1234 = vld [vmem:[#allocation2 + $0xc0] sm:$0xc0]
        %v1235 = vld [vmem:[#allocation2 + $0xc8] sm:$0xc0]
        %v1236 = vld [vmem:[#allocation2 + $0xd0] sm:$0xc0]
        %v1237 = vld [vmem:[#allocation2 + $0xd8] sm:$0xc0]
        %v1238 = vld [vmem:[#allocation2 + $0xe0] sm:$0xff]
        %v1239 = vld [vmem:[#allocation2 + $0xe8] sm:$0xff]
        %v1240 = vld [vmem:[#allocation2 + $0xf0] sm:$0xff]
        %v1241 = vld [vmem:[#allocation2 + $0xf8] sm:$0xff]
        %v1242 = vld [vmem:[#allocation2 + $0x100] sm:$0xff]
        %v1243 = vld [vmem:[#allocation2 + $0x108] sm:$0xff]
        %v1244 = vld [vmem:[#allocation2 + $0x110] sm:$0xff]
        %v1245 = vld [vmem:[#allocation2 + $0x118] sm:$0xff]
        %v1258 = vrot.slane %v1234, 6
        %v1259 = vrot.slane %v1238, 6
        %v1260 = vsel %vm795, %v1258, %v1259
        %v1261 = vrot.slane %v1235, 6
        %v1262 = vrot.slane %v1239, 6
        %v1263 = vsel %vm795, %v1261, %v1262
        %v1264 = vrot.slane %v1236, 6
        %v1265 = vrot.slane %v1240, 6
        %v1266 = vsel %vm795, %v1264, %v1265
        %v1267 = vrot.slane %v1237, 6
        %v1268 = vrot.slane %v1241, 6
        %v1269 = vsel %vm795, %v1267, %v1268
        %v1270 = vrot.slane %v1242, 6
        %v1271 = vsel %vm795, %v1259, %v1270
        %v1272 = vrot.slane %v1243, 6
        %v1273 = vsel %vm795, %v1262, %v1272
        %v1274 = vrot.slane %v1244, 6
        %v1275 = vsel %vm795, %v1265, %v1274
        %v1276 = vrot.slane %v1245, 6
        %v1277 = vsel %vm795, %v1268, %v1276
        %v1286 = vrot.slane %v789, 6
        %v1289 = vsel %vm791, %v1233, 0
        %v1291 = vsel %vm795, %v1270, 0
        %v1293 = vsel %vm795, %v1272, 0
        %v1295 = vsel %vm795, %v1274, 0
        %v1297 = vsel %vm795, %v1276, 0
        %1299 = vmatpush.msra.mxu0 0.0
        %1300 = vmatpush.msra.mxu0 0.0
        %1301 = vmatpush.msra.mxu0 0.0
        %1302 = vmatpush.msra.mxu0 0.0
        %1303 = vmatpush.msra.mxu0 0.0
        %1304 = vmatpush.msra.mxu0 0.0
        %1305 = vmatpush.msra.mxu0 0.0
        %1306 = vmatpush.msra.mxu0 0.0
        %1307 = vmatpush.msra.mxu0 0.0
        %1308 = vmatpush.msra.mxu0 0.0
        %1309 = vmatpush.msra.mxu0 0.0
        %1310 = vmatpush.msra.mxu0 0.0
        %1311 = vmatpush.msra.mxu0 0.0
        %1312 = vmatpush.msra.mxu0 %v1291
        %1313 = vmatpush.msra.mxu0 %v1271
        %1314 = vmatpush.msra.mxu0 %v1260
        %1315 = vmatmul.f32.gmra.mxu0 %v1289
        %v1316 = vpop.f32.mrf.mxu0
        %v1317 = vadd.f32 %v1286, %v1316
        %1318 = vdwg.mxu0
        %1319 = vmatpush.msra.mxu0 0.0
        %1320 = vmatpush.msra.mxu0 0.0
        %1321 = vmatpush.msra.mxu0 0.0
        %1322 = vmatpush.msra.mxu0 0.0
        %1323 = vmatpush.msra.mxu0 0.0
        %1324 = vmatpush.msra.mxu0 0.0
        %1325 = vmatpush.msra.mxu0 0.0
        %1326 = vmatpush.msra.mxu0 0.0
        %1327 = vmatpush.msra.mxu0 0.0
        %1328 = vmatpush.msra.mxu0 0.0
        %1329 = vmatpush.msra.mxu0 0.0
        %1330 = vmatpush.msra.mxu0 0.0
        %1331 = vmatpush.msra.mxu0 0.0
        %1332 = vmatpush.msra.mxu0 %v1293
        %1333 = vmatpush.msra.mxu0 %v1273
        %1334 = vmatpush.msra.mxu0 %v1263
        %1335 = vmatmul.f32.gmra.mxu0 %v1289
        %v1336 = vpop.f32.mrf.mxu0
        %v1337 = vadd.f32 %v1286, %v1336
        %1338 = vdwg.mxu0
        %1339 = vmatpush.msra.mxu0 0.0
        %1340 = vmatpush.msra.mxu0 0.0
        %1341 = vmatpush.msra.mxu0 0.0
        %1342 = vmatpush.msra.mxu0 0.0
        %1343 = vmatpush.msra.mxu0 0.0
        %1344 = vmatpush.msra.mxu0 0.0
        %1345 = vmatpush.msra.mxu0 0.0
        %1346 = vmatpush.msra.mxu0 0.0
        %1347 = vmatpush.msra.mxu0 0.0
        %1348 = vmatpush.msra.mxu0 0.0
        %1349 = vmatpush.msra.mxu0 0.0
        %1350 = vmatpush.msra.mxu0 0.0
        %1351 = vmatpush.msra.mxu0 0.0
        %1352 = vmatpush.msra.mxu0 %v1295
        %1353 = vmatpush.msra.mxu0 %v1275
        %1354 = vmatpush.msra.mxu0 %v1266
        %1355 = vmatmul.f32.gmra.mxu0 %v1289
        %v1356 = vpop.f32.mrf.mxu0
        %v1357 = vadd.f32 %v1286, %v1356
        %1358 = vdwg.mxu0
        %1359 = vmatpush.msra.mxu0 0.0
        %1360 = vmatpush.msra.mxu0 0.0
        %1361 = vmatpush.msra.mxu0 0.0
        %1362 = vmatpush.msra.mxu0 0.0
        %1363 = vmatpush.msra.mxu0 0.0
        %1364 = vmatpush.msra.mxu0 0.0
        %1365 = vmatpush.msra.mxu0 0.0
        %1366 = vmatpush.msra.mxu0 0.0
        %1367 = vmatpush.msra.mxu0 0.0
        %1368 = vmatpush.msra.mxu0 0.0
        %1369 = vmatpush.msra.mxu0 0.0
        %1370 = vmatpush.msra.mxu0 0.0
        %1371 = vmatpush.msra.mxu0 0.0
        %1372 = vmatpush.msra.mxu0 %v1297
        %1373 = vmatpush.msra.mxu0 %v1277
        %1374 = vmatpush.msra.mxu0 %v1269
        %1375 = vmatmul.f32.gmra.mxu0 %v1289
        %v1376 = vpop.f32.mrf.mxu0
        %v1377 = vadd.f32 %v1286, %v1376
        %1378 = vdwg.mxu0
        %v1379 = vmax.f32 %v1317, 0.0
        %v1380 = vmax.f32 %v1337, 0.0
        %v1381 = vmax.f32 %v1357, 0.0
        %v1382 = vmax.f32 %v1377, 0.0
        %v1387 = vrot.slane %v1379, 2
        %v1388 = vrot.slane %v1380, 2
        %v1389 = vrot.slane %v1381, 2
        %v1390 = vrot.slane %v1382, 2
        %1395 = vst [vmem:[#allocation3] sm:$0xc0] %v1387
        %1396 = vst [vmem:[#allocation3 + $0x8] sm:$0xc0] %v1388
        %1397 = vst [vmem:[#allocation3 + $0x10] sm:$0xc0] %v1389
        %1398 = vst [vmem:[#allocation3 + $0x18] sm:$0xc0] %v1390
        %1399 = vst [vmem:[#allocation3 + $0x20] sm:$0xff] %v494
        %1400 = vst [vmem:[#allocation3 + $0x28] sm:$0xff] %v495
        %1401 = vst [vmem:[#allocation3 + $0x30] sm:$0xff] %v504
        %1402 = vst [vmem:[#allocation3 + $0x38] sm:$0xff] %v505
        %v1403 = vld [vmem:[%s5] sm:$0xff]
        %v1404 = vld [vmem:[%s6] sm:$0xff]
        %1406 = vset.pattern.permute.xlu0 0
        %1407 = vperm.xlu0 %1406, %v1404
        %v1408 = vpop.permute.xlu0 %1407
        %vm1410 = vcmask 64512
        %v1412 = vsel %vm1410, %v1403, 0
        %1414 = vmatpush.msra.mxu0 0.0
        %1415 = vmatpush.msra.mxu0 0.0
        %1416 = vmatpush.msra.mxu0 0.0
        %1417 = vmatpush.msra.mxu0 0.0
        %1418 = vmatpush.msra.mxu0 0.0
        %1419 = vmatpush.msra.mxu0 0.0
        %1420 = vmatpush.msra.mxu0 0.0
        %1421 = vmatpush.msra.mxu0 0.0
        %1422 = vmatpush.msra.mxu0 0.0
        %1423 = vmatpush.msra.mxu0 0.0
        %1424 = vmatpush.msra.mxu0 0.0
        %1425 = vmatpush.msra.mxu0 0.0
        %1426 = vmatpush.msra.mxu0 0.0
        %1427 = vmatpush.msra.mxu0 0.0
        %1428 = vmatpush.msra.mxu0 0.0
        %1429 = vmatpush.msra.mxu0 %v494
        %1430 = vmatmul.f32.gmra.mxu0 %v1412
        %v1431 = vpop.f32.mrf.mxu0
        %v1432 = vadd.f32 %v1408, %v1431
        %1433 = vdwg.mxu0
        %1434 = vmatpush.msra.mxu0 0.0
        %1435 = vmatpush.msra.mxu0 0.0
        %1436 = vmatpush.msra.mxu0 0.0
        %1437 = vmatpush.msra.mxu0 0.0
        %1438 = vmatpush.msra.mxu0 0.0
        %1439 = vmatpush.msra.mxu0 0.0
        %1440 = vmatpush.msra.mxu0 0.0
        %1441 = vmatpush.msra.mxu0 0.0
        %1442 = vmatpush.msra.mxu0 0.0
        %1443 = vmatpush.msra.mxu0 0.0
        %1444 = vmatpush.msra.mxu0 0.0
        %1445 = vmatpush.msra.mxu0 0.0
        %1446 = vmatpush.msra.mxu0 0.0
        %1447 = vmatpush.msra.mxu0 0.0
        %1448 = vmatpush.msra.mxu0 0.0
        %1449 = vmatpush.msra.mxu0 %v495
        %1450 = vmatmul.f32.gmra.mxu0 %v1412
        %v1451 = vpop.f32.mrf.mxu0
        %v1452 = vadd.f32 %v1408, %v1451
        %1453 = vdwg.mxu0
        %1454 = vmatpush.msra.mxu0 0.0
        %1455 = vmatpush.msra.mxu0 0.0
        %1456 = vmatpush.msra.mxu0 0.0
        %1457 = vmatpush.msra.mxu0 0.0
        %1458 = vmatpush.msra.mxu0 0.0
        %1459 = vmatpush.msra.mxu0 0.0
        %1460 = vmatpush.msra.mxu0 0.0
        %1461 = vmatpush.msra.mxu0 0.0
        %1462 = vmatpush.msra.mxu0 0.0
        %1463 = vmatpush.msra.mxu0 0.0
        %1464 = vmatpush.msra.mxu0 0.0
        %1465 = vmatpush.msra.mxu0 0.0
        %1466 = vmatpush.msra.mxu0 0.0
        %1467 = vmatpush.msra.mxu0 0.0
        %1468 = vmatpush.msra.mxu0 0.0
        %1469 = vmatpush.msra.mxu0 %v504
        %1470 = vmatmul.f32.gmra.mxu0 %v1412
        %v1471 = vpop.f32.mrf.mxu0
        %v1472 = vadd.f32 %v1408, %v1471
        %1473 = vdwg.mxu0
        %1474 = vmatpush.msra.mxu0 0.0
        %1475 = vmatpush.msra.mxu0 0.0
        %1476 = vmatpush.msra.mxu0 0.0
        %1477 = vmatpush.msra.mxu0 0.0
        %1478 = vmatpush.msra.mxu0 0.0
        %1479 = vmatpush.msra.mxu0 0.0
        %1480 = vmatpush.msra.mxu0 0.0
        %1481 = vmatpush.msra.mxu0 0.0
        %1482 = vmatpush.msra.mxu0 0.0
        %1483 = vmatpush.msra.mxu0 0.0
        %1484 = vmatpush.msra.mxu0 0.0
        %1485 = vmatpush.msra.mxu0 0.0
        %1486 = vmatpush.msra.mxu0 0.0
        %1487 = vmatpush.msra.mxu0 0.0
        %1488 = vmatpush.msra.mxu0 0.0
        %1489 = vmatpush.msra.mxu0 %v505
        %1490 = vmatmul.f32.gmra.mxu0 %v1412
        %v1491 = vpop.f32.mrf.mxu0
        %v1492 = vadd.f32 %v1408, %v1491
        %1493 = vdwg.mxu0
        %v1494 = vld [vmem:[%s7] sm:$0xf]
        %v1495 = vld [vmem:[#allocation3] sm:$0xff]
        %v1496 = vld [vmem:[#allocation3 + $0x8] sm:$0xff]
        %v1497 = vld [vmem:[#allocation3 + $0x10] sm:$0xff]
        %v1498 = vld [vmem:[#allocation3 + $0x18] sm:$0xff]
        %v1499 = vld [vmem:[#allocation3 + $0x20] sm:$0xff]
        %v1500 = vld [vmem:[#allocation3 + $0x28] sm:$0xff]
        %v1501 = vld [vmem:[#allocation3 + $0x30] sm:$0xff]
        %v1502 = vld [vmem:[#allocation3 + $0x38] sm:$0xff]
        %v1503 = vld [vmem:[%s8] sm:$0xf]
        %1505 = vset.pattern.permute.xlu0 0
        %1506 = vperm.xlu0 %1505, %v1503
        %v1507 = vpop.permute.xlu0 %1506
        %vm1509 = vcmask 130048
        %v1511 = vsel %vm1509, %v1494, 0
        %1513 = vmatpush.msra.mxu0 0.0
        %1514 = vmatpush.msra.mxu0 0.0
        %1515 = vmatpush.msra.mxu0 0.0
        %1516 = vmatpush.msra.mxu0 0.0
        %1517 = vmatpush.msra.mxu0 0.0
        %1518 = vmatpush.msra.mxu0 0.0
        %1519 = vmatpush.msra.mxu0 0.0
        %1520 = vmatpush.msra.mxu0 0.0
        %1521 = vmatpush.msra.mxu0 0.0
        %1522 = vmatpush.msra.mxu0 0.0
        %1523 = vmatpush.msra.mxu0 0.0
        %1524 = vmatpush.msra.mxu0 0.0
        %1525 = vmatpush.msra.mxu0 0.0
        %1526 = vmatpush.msra.mxu0 0.0
        %1527 = vmatpush.msra.mxu0 %v1499
        %1528 = vmatpush.msra.mxu0 %v1495
        %1529 = vmatmul.f32.gmra.mxu0 %v1511
        %v1530 = vpop.f32.mrf.mxu0
        %v1531 = vadd.f32 %v1507, %v1530
        %1532 = vdwg.mxu0
        %1533 = vmatpush.msra.mxu0 0.0
        %1534 = vmatpush.msra.mxu0 0.0
        %1535 = vmatpush.msra.mxu0 0.0
        %1536 = vmatpush.msra.mxu0 0.0
        %1537 = vmatpush.msra.mxu0 0.0
        %1538 = vmatpush.msra.mxu0 0.0
        %1539 = vmatpush.msra.mxu0 0.0
        %1540 = vmatpush.msra.mxu0 0.0
        %1541 = vmatpush.msra.mxu0 0.0
        %1542 = vmatpush.msra.mxu0 0.0
        %1543 = vmatpush.msra.mxu0 0.0
        %1544 = vmatpush.msra.mxu0 0.0
        %1545 = vmatpush.msra.mxu0 0.0
        %1546 = vmatpush.msra.mxu0 0.0
        %1547 = vmatpush.msra.mxu0 %v1500
        %1548 = vmatpush.msra.mxu0 %v1496
        %1549 = vmatmul.f32.gmra.mxu0 %v1511
        %v1550 = vpop.f32.mrf.mxu0
        %v1551 = vadd.f32 %v1507, %v1550
        %1552 = vdwg.mxu0
        %1553 = vmatpush.msra.mxu0 0.0
        %1554 = vmatpush.msra.mxu0 0.0
        %1555 = vmatpush.msra.mxu0 0.0
        %1556 = vmatpush.msra.mxu0 0.0
        %1557 = vmatpush.msra.mxu0 0.0
        %1558 = vmatpush.msra.mxu0 0.0
        %1559 = vmatpush.msra.mxu0 0.0
        %1560 = vmatpush.msra.mxu0 0.0
        %1561 = vmatpush.msra.mxu0 0.0
        %1562 = vmatpush.msra.mxu0 0.0
        %1563 = vmatpush.msra.mxu0 0.0
        %1564 = vmatpush.msra.mxu0 0.0
        %1565 = vmatpush.msra.mxu0 0.0
        %1566 = vmatpush.msra.mxu0 0.0
        %1567 = vmatpush.msra.mxu0 %v1501
        %1568 = vmatpush.msra.mxu0 %v1497
        %1569 = vmatmul.f32.gmra.mxu0 %v1511
        %v1570 = vpop.f32.mrf.mxu0
        %v1571 = vadd.f32 %v1507, %v1570
        %1572 = vdwg.mxu0
        %1573 = vmatpush.msra.mxu0 0.0
        %1574 = vmatpush.msra.mxu0 0.0
        %1575 = vmatpush.msra.mxu0 0.0
        %1576 = vmatpush.msra.mxu0 0.0
        %1577 = vmatpush.msra.mxu0 0.0
        %1578 = vmatpush.msra.mxu0 0.0
        %1579 = vmatpush.msra.mxu0 0.0
        %1580 = vmatpush.msra.mxu0 0.0
        %1581 = vmatpush.msra.mxu0 0.0
        %1582 = vmatpush.msra.mxu0 0.0
        %1583 = vmatpush.msra.mxu0 0.0
        %1584 = vmatpush.msra.mxu0 0.0
        %1585 = vmatpush.msra.mxu0 0.0
        %1586 = vmatpush.msra.mxu0 0.0
        %1587 = vmatpush.msra.mxu0 %v1502
        %1588 = vmatpush.msra.mxu0 %v1498
        %1589 = vmatmul.f32.gmra.mxu0 %v1511
        %v1590 = vpop.f32.mrf.mxu0
        %v1591 = vadd.f32 %v1507, %v1590
        %1592 = vdwg.mxu0
        %v1593 = vmax.f32 %v1531, 0.0
        %v1594 = vmax.f32 %v1551, 0.0
        %v1595 = vmax.f32 %v1571, 0.0
        %v1596 = vmax.f32 %v1591, 0.0
        %v1597 = vld [vmem:[%s9] sm:$0xff]
        %vm1598 = vcmask 31744
        %v1600 = vsel %vm1598, %v1597, 0
        %v1603 = vsel %vm1090, %v1593, 0
        %v1606 = vsel %vm1090, %v1594, 0
        %v1609 = vsel %vm1090, %v1595, 0
        %v1612 = vsel %vm1090, %v1596, 0
        %1614 = vmatpush.msra.mxu0 0.0
        %1615 = vmatpush.msra.mxu0 0.0
        %1616 = vmatpush.msra.mxu0 0.0
        %1617 = vmatpush.msra.mxu0 0.0
        %1618 = vmatpush.msra.mxu0 0.0
        %1619 = vmatpush.msra.mxu0 0.0
        %1620 = vmatpush.msra.mxu0 0.0
        %1621 = vmatpush.msra.mxu0 0.0
        %1622 = vmatpush.msra.mxu0 0.0
        %1623 = vmatpush.msra.mxu0 0.0
        %1624 = vmatpush.msra.mxu0 0.0
        %1625 = vmatpush.msra.mxu0 0.0
        %1626 = vmatpush.msra.mxu0 0.0
        %1627 = vmatpush.msra.mxu0 0.0
        %1628 = vmatpush.msra.mxu0 0.0
        %1629 = vmatpush.msra.mxu0 %v1603
        %1630 = vmatmul.f32.gmra.mxu0 %v1600
        %v1631 = vpop.f32.mrf.mxu0
        %v1632 = vadd.f32 0.0, %v1631
        %1633 = vdwg.mxu0
        %1634 = vmatpush.msra.mxu0 0.0
        %1635 = vmatpush.msra.mxu0 0.0
        %1636 = vmatpush.msra.mxu0 0.0
        %1637 = vmatpush.msra.mxu0 0.0
        %1638 = vmatpush.msra.mxu0 0.0
        %1639 = vmatpush.msra.mxu0 0.0
        %1640 = vmatpush.msra.mxu0 0.0
        %1641 = vmatpush.msra.mxu0 0.0
        %1642 = vmatpush.msra.mxu0 0.0
        %1643 = vmatpush.msra.mxu0 0.0
        %1644 = vmatpush.msra.mxu0 0.0
        %1645 = vmatpush.msra.mxu0 0.0
        %1646 = vmatpush.msra.mxu0 0.0
        %1647 = vmatpush.msra.mxu0 0.0
        %1648 = vmatpush.msra.mxu0 0.0
        %1649 = vmatpush.msra.mxu0 %v1606
        %1650 = vmatmul.f32.gmra.mxu0 %v1600
        %v1651 = vpop.f32.mrf.mxu0
        %v1652 = vadd.f32 0.0, %v1651
        %1653 = vdwg.mxu0
        %1654 = vmatpush.msra.mxu0 0.0
        %1655 = vmatpush.msra.mxu0 0.0
        %1656 = vmatpush.msra.mxu0 0.0
        %1657 = vmatpush.msra.mxu0 0.0
        %1658 = vmatpush.msra.mxu0 0.0
        %1659 = vmatpush.msra.mxu0 0.0
        %1660 = vmatpush.msra.mxu0 0.0
        %1661 = vmatpush.msra.mxu0 0.0
        %1662 = vmatpush.msra.mxu0 0.0
        %1663 = vmatpush.msra.mxu0 0.0
        %1664 = vmatpush.msra.mxu0 0.0
        %1665 = vmatpush.msra.mxu0 0.0
        %1666 = vmatpush.msra.mxu0 0.0
        %1667 = vmatpush.msra.mxu0 0.0
        %1668 = vmatpush.msra.mxu0 0.0
        %1669 = vmatpush.msra.mxu0 %v1609
        %1670 = vmatmul.f32.gmra.mxu0 %v1600
        %v1671 = vpop.f32.mrf.mxu0
        %v1672 = vadd.f32 0.0, %v1671
        %1673 = vdwg.mxu0
        %1674 = vmatpush.msra.mxu0 0.0
        %1675 = vmatpush.msra.mxu0 0.0
        %1676 = vmatpush.msra.mxu0 0.0
        %1677 = vmatpush.msra.mxu0 0.0
        %1678 = vmatpush.msra.mxu0 0.0
        %1679 = vmatpush.msra.mxu0 0.0
        %1680 = vmatpush.msra.mxu0 0.0
        %1681 = vmatpush.msra.mxu0 0.0
        %1682 = vmatpush.msra.mxu0 0.0
        %1683 = vmatpush.msra.mxu0 0.0
        %1684 = vmatpush.msra.mxu0 0.0
        %1685 = vmatpush.msra.mxu0 0.0
        %1686 = vmatpush.msra.mxu0 0.0
        %1687 = vmatpush.msra.mxu0 0.0
        %1688 = vmatpush.msra.mxu0 0.0
        %1689 = vmatpush.msra.mxu0 %v1612
        %1690 = vmatmul.f32.gmra.mxu0 %v1600
        %v1691 = vpop.f32.mrf.mxu0
        %v1692 = vadd.f32 0.0, %v1691
        %1693 = vdwg.mxu0
        %v1694 = vld [vmem:[#allocation3] sm:$0xff]
        %v1695 = vld [vmem:[#allocation3 + $0x8] sm:$0xff]
        %v1696 = vld [vmem:[#allocation3 + $0x10] sm:$0xff]
        %v1697 = vld [vmem:[#allocation3 + $0x18] sm:$0xff]
        %v1698 = vmax.f32 %v1632, %v1652
        %1699 = vmax.xlane.f32.xlu0 %v1698
        %v1700 = vpop.xlane.xlu0 %1699
        %v1701 = vsub.f32 %v1632, %v1700
        %v1702 = vsub.f32 %v1652, %v1700
        %v1703 = vmul.f32 %v1701, 1.442695
        %v1704 = vpow.pop %v1703
        %v1705 = vmul.f32 %v1702, 1.442695
        %v1706 = vpow.pop %v1705
        %v1707 = vadd.f32 %v1704, %v1706
        %1708 = vadd.xlane.f32.xlu0 %v1707
        %v1709 = vpop.xlane.xlu0 %1708
        %v1710 = vrcp.pop %v1709
        %v1711 = vmul.f32 %v1709, %v1710
        %v1712 = vsub.f32 1.0, %v1711
        %v1713 = vmul.f32 %v1710, %v1712
        %v1714 = vadd.f32 %v1710, %v1713
        %vm1715 = vweird.f32 %v1709
        %vm1716 = vweird.f32 %v1710
        %vm1717 = vmor %vm1715, %vm1716
        %v1718 = vsel %vm1717, %v1710, %v1714
        %v1719 = vand.u32 2147483647, %v1709
        %vm1720 = vcmp.eq.f32.partialorder %v1719, 8.507059e+37
        %v1721 = vand.u32 %v1709, 2147483648
        %v1722 = vor.u32 1.1754944e-38, %v1721
        %v1723 = vsel %vm1720, %v1722, %v1718
        %v1724 = vmul.f32 %v1704, %v1723
        %v1725 = vmul.f32 %v1706, %v1723
        %v1726 = vmul.f32 %v1724, %v1432
        %v1727 = vmul.f32 %v1725, %v1452
        %v1728 = vadd.f32 %v1694, %v1726
        %v1729 = vadd.f32 %v1695, %v1727
        %1730 = vst [vmem:[%s380] sm:$0xff] %v1728
        %1731 = vst [vmem:[%s380 + $0x8] sm:$0xff] %v1729
        %v1732 = vmax.f32 %v1672, %v1692
        %1733 = vmax.xlane.f32.xlu0 %v1732
        %v1734 = vpop.xlane.xlu0 %1733
        %v1735 = vsub.f32 %v1672, %v1734
        %v1736 = vsub.f32 %v1692, %v1734
        %v1737 = vmul.f32 %v1735, 1.442695
        %v1738 = vpow.pop %v1737
        %v1739 = vmul.f32 %v1736, 1.442695
        %v1740 = vpow.pop %v1739
        %v1741 = vadd.f32 %v1738, %v1740
        %1742 = vadd.xlane.f32.xlu0 %v1741
        %v1743 = vpop.xlane.xlu0 %1742
        %v1744 = vrcp.pop %v1743
        %v1745 = vmul.f32 %v1743, %v1744
        %v1746 = vsub.f32 1.0, %v1745
        %v1747 = vmul.f32 %v1744, %v1746
        %v1748 = vadd.f32 %v1744, %v1747
        %vm1749 = vweird.f32 %v1743
        %vm1750 = vweird.f32 %v1744
        %vm1751 = vmor %vm1749, %vm1750
        %v1752 = vsel %vm1751, %v1744, %v1748
        %v1753 = vand.u32 2147483647, %v1743
        %vm1754 = vcmp.eq.f32.partialorder %v1753, 8.507059e+37
        %v1755 = vand.u32 %v1743, 2147483648
        %v1756 = vor.u32 1.1754944e-38, %v1755
        %v1757 = vsel %vm1754, %v1756, %v1752
        %v1758 = vmul.f32 %v1738, %v1757
        %v1759 = vmul.f32 %v1740, %v1757
        %v1760 = vmul.f32 %v1758, %v1472
        %v1761 = vmul.f32 %v1759, %v1492
        %v1762 = vadd.f32 %v1696, %v1760
        %v1763 = vadd.f32 %v1697, %v1761
        %s1764 = scalar_lea.vmem %s380, 16 [#allocation7]
        %1765 = vst [vmem:[%s1764] sm:$0xff] %v1762
        %1766 = vst [vmem:[%s1764 + $0x8] sm:$0xff] %v1763
        %s1767 = sand.u32 %s250, 1
        %s1768 = scalar_lea.sflag [#allocation6], %s1767
        %s1769 = sand.u32 %s250, 1
        %s1770 = smul.addr %s1769, 32
        %s1771 = scalar_lea.vmem [#allocation7], %s1770
        // Predicated region
        $region65: #{tpu_custom_call.1} parent=59 // pred_check
          %p1772 = pneg %p260
        $region66: #{tpu_custom_call.1} parent=59 // pred_check_branch
          %1774 = sbr.rel (%p1772) target = $region68
        $region67: #{tpu_custom_call.1} parent=59 // pred_region
          %s1775 = smul.u32 2, %s27
          %1777 = vsyncadd %s1768, 0
          %s1778 = smul.addr %s1775, 2
          %s1779 = smul.addr %s1778, 8
          %s1780 = scalar_lea.hbm %s10, %s1779
          %s1781 = sshll.u32 %s1771, 4
          %s1782 = int_to_ptr.vmem [resolvable:$true] %s1781
          %s1783 = sshll.u32 %s1780, 4
          %s1784 = int_to_ptr.hbm [resolvable:$true] %s1783
          %1789 = dma.vmem_to_hbm [thread:$0]  %s1782, 512, %s1784, %s1768, 256, 256, 16
        $region68: #{tpu_custom_call.1} parent=59 // pred_fallthru
          _
      $region60: #{tpu_custom_call.1} parent=5 // pred_fallthru
        _
      %p1790 = scmp.le.s32.totalorder 2, %s22
      // Predicated region
      $region69: #{tpu_custom_call.1} parent=5 // pred_check
        %p1791 = pneg %p1790
      $region70: #{tpu_custom_call.1} parent=5 // pred_check_branch
        %1793 = sbr.rel (%p1791) target = $region72
      $region71: #{tpu_custom_call.1} parent=5 // pred_region
        %s1794 = ssub.s32 %s22, 2
        // Predicated region
        $region73: #{tpu_custom_call.1} parent=71 // pred_check
          %p1795 = pneg %p266
        $region74: #{tpu_custom_call.1} parent=71 // pred_check_branch
          %1797 = sbr.rel (%p1795) target = $region76
        $region75: #{tpu_custom_call.1} parent=71 // pred_region
          %s1798 = sand.u32 %s251, 1
          %s1799 = scalar_lea.sflag [#allocation6], %s1798
          %s1800 = sand.u32 %s251, 1
          %s1801 = smul.addr %s1800, 32
          %s1802 = scalar_lea.vmem [#allocation7], %s1801
          %1804 = dma.done %s1799, 512
        $region76: #{tpu_custom_call.1} parent=71 // pred_fallthru
          _
      $region72: #{tpu_custom_call.1} parent=5 // pred_fallthru
        _
    $region6: #{tpu_custom_call.1} parent=1 // loop_footer
      %s26 = sadd.s32 1, %s22
    $region7: #{tpu_custom_call.1} parent=1 // loop_footer_branch
      %21 = sbr.rel target = $region3
    $region8: #{tpu_custom_call.1} parent=1 // loop_exit
      _
    %1805 = vsyncpa [#allocation5], 1
    %s1806 = scalar_lea.sflag [#allocation5], 1
    %1807 = vsyncpa %s1806, 1
    %1808 = vsyncpa [#allocation6], 1
    %s1809 = scalar_lea.sflag [#allocation6], 1
    %1810 = vsyncpa %s1809, 1

</llo_original>
